<compile_context>
chip_gen: v7x
topology: tpu7x:2x2x1
jax: 0.10.0
libtpu: 0.0.40
codegen_flags: <defaults>
</compile_context>

<pallas_src>
import functools

import jax
import jax.numpy as jnp
from jax import lax
from jax.experimental import pallas as pl
from jax.experimental.pallas import tpu as pltpu


def _conv_block_kernel(x_ref, w1_ref, b1_ref, w2_ref, b2_ref, o_ref, *,
                       H, W, negative_slope):
    # x_ref  : (1, Cin, H*W)   one batch element, channel-major, flat spatial
    # w1_ref : (Cout, 9*Cin)   conv1 weights, columns ordered (tap, cin)
    # b1_ref : (Cout, 1)
    # w2_ref : (Cout, 9*Cout)  conv2 weights
    # b2_ref : (Cout, 1)
    # o_ref  : (1, Cout, H*W)  output (already NCHW when reshaped)
    HW = H * W

    # Output-pixel column index per flattened position (lane-wise), used to
    # mask horizontal taps that would otherwise read across row boundaries.
    col = jax.lax.broadcasted_iota(jnp.int32, (1, HW), 1) % W

    def conv3x3_leaky(x, w_ref, b_ref):
        # x: (C, HW) float32.  Returns (Cout, HW) float32 = LeakyReLU(conv(x)).
        C = x.shape[0]
        pad = jnp.zeros((C, W + 1), jnp.float32)
        # Zero-extended flattened slab: index (W+1)+p+s reads x[p+s], and gives
        # exact zeros whenever p+s falls off the top/bottom of the image.
        xext = jnp.concatenate([pad, x, pad], axis=1)       # (C, HW + 2W + 2)
        xext = xext.astype(jnp.bfloat16)                    # cast once per slab
        w_all = w_ref[...].astype(jnp.bfloat16)             # (Cout, 9*C)

        acc = jnp.zeros((w_all.shape[0], HW), jnp.float32)
        t = 0
        for ky in (-1, 0, 1):
            for kx in (-1, 0, 1):
                s = ky * W + kx
                start = (W + 1) + s
                tap = xext[:, start:start + HW]              # tap[:, p] = x[:, p+s]
                # Mask row-crossing horizontal neighbours (vertical
                # out-of-range taps already hit the zero extension).
                if kx == 1:
                    tap = jnp.where(col < (W - 1), tap, jnp.zeros_like(tap))
                elif kx == -1:
                    tap = jnp.where(col >= 1, tap, jnp.zeros_like(tap))
                acc = acc + jnp.dot(w_all[:, t * C:(t + 1) * C], tap,
                                    preferred_element_type=jnp.float32)
                t += 1

        acc = acc + b_ref[...]                               # (Cout, 1) broadcast
        return jnp.where(acc >= 0.0, acc, negative_slope * acc)

    x = x_ref[0].astype(jnp.float32)                         # (Cin, HW)
    y = conv3x3_leaky(x, w1_ref, b1_ref)                     # conv1 + act (stays on-chip)
    y = conv3x3_leaky(y, w2_ref, b2_ref)                     # conv2 + act
    o_ref[0] = y.astype(o_ref.dtype)                         # lane-dense (Cout, HW) store


def conv_block_forward(x_nchw, params, negative_slope=0.1):
    """Pallas equivalent of ConvBlock.forward (input/output in NCHW)."""
    N, Cin, H, W = x_nchw.shape
    Cout = params["w1"].shape[-1]
    HW = H * W

    # Free reshape: NCHW is already channel-major / contiguous spatial.
    x_flat = x_nchw.reshape(N, Cin, HW)
    # HWIO (3,3,Ci,Co) -> (Co, 3,3,Ci) -> (Co, 9*Ci); column order = (tap, cin).
    w1m = jnp.transpose(params["w1"], (3, 0, 1, 2)).reshape(Cout, 9 * Cin)
    w2m = jnp.transpose(params["w2"], (3, 0, 1, 2)).reshape(Cout, 9 * Cout)
    b1 = params["b1"].reshape(Cout, 1).astype(jnp.float32)
    b2 = params["b2"].reshape(Cout, 1).astype(jnp.float32)

    kernel = functools.partial(_conv_block_kernel, H=H, W=W,
                               negative_slope=negative_slope)
    out_flat = pl.pallas_call(
        kernel,
        out_shape=jax.ShapeDtypeStruct((N, Cout, HW), x_nchw.dtype),
        grid_spec=pltpu.PrefetchScalarGridSpec(
            num_scalar_prefetch=0,
            grid=(N,),
            in_specs=[
                pl.BlockSpec((1, Cin, HW), lambda n: (n, 0, 0)),
                pl.BlockSpec((Cout, 9 * Cin), lambda n: (0, 0)),
                pl.BlockSpec((Cout, 1), lambda n: (0, 0)),
                pl.BlockSpec((Cout, 9 * Cout), lambda n: (0, 0)),
                pl.BlockSpec((Cout, 1), lambda n: (0, 0)),
            ],
            out_specs=pl.BlockSpec((1, Cout, HW), lambda n: (n, 0, 0)),
        ),
        compiler_params=pltpu.CompilerParams(
            dimension_semantics=("parallel",)),
    )(x_flat, w1m, b1, w2m, b2)
    return out_flat.reshape(N, Cout, H, W)


def init_params(key, in_channels, out_channels, dtype=jnp.float32):
    k1, k2, k3, k4 = jax.random.split(key, 4)
    # PyTorch weight layout is (Cout, Cin, 3, 3); we store HWIO = (3, 3, Cin, Cout).
    w1 = 0.1 * jax.random.normal(k1, (3, 3, in_channels, out_channels), dtype)
    b1 = 0.1 * jax.random.normal(k2, (out_channels,), dtype)
    w2 = 0.1 * jax.random.normal(k3, (3, 3, out_channels, out_channels), dtype)
    b2 = 0.1 * jax.random.normal(k4, (out_channels,), dtype)
    return {"w1": w1, "b1": b1, "w2": w2, "b2": b2}


def _reference_forward(x_nchw, params):
    """Pure-JAX f32 reference (lax.conv) for correctness checking."""
    def conv(x, w, b):
        y = lax.conv_general_dilated(
            x, w, window_strides=(1, 1), padding="SAME",
            dimension_numbers=("NCHW", "HWIO", "NCHW"))
        y = y + b.reshape(1, -1, 1, 1)
        return jnp.where(y >= 0.0, y, 0.1 * y)
    x = conv(x_nchw, params["w1"], params["b1"])
    x = conv(x, params["w2"], params["b2"])
    return x


if __name__ == "__main__":
    key = jax.random.PRNGKey(0)
    kx, kp = jax.random.split(key)

    N, Cin, H, W = 2, 4, 16, 16
    Cout = 8
    x = jax.random.normal(kx, (N, Cin, H, W), jnp.float32)
    params = init_params(kp, Cin, Cout)

    out = conv_block_forward(x, params)
    out = jax.block_until_ready(out)

    ref = _reference_forward(x, params)
    assert out.shape == (N, Cout, H, W), out.shape
    # bf16 MXU operands with f32 accumulation -> loosened tolerance vs f32 ref
    # (expected max abs error ~1e-2 at these magnitudes).
    assert jnp.allclose(out, ref, atol=3e-2, rtol=3e-2), "mismatch vs reference"

    print("KERNEL_OK")
</pallas_src>

<mosaic_0001>
module attributes {stable_mosaic.version = 11 : i64} {
  func.func @_conv_block_kernel(%arg0: i32, %arg1: memref<1x4x256xf32, #tpu.memory_space<vmem>>, %arg2: memref<8x36xf32, #tpu.memory_space<vmem>>, %arg3: memref<8x1xf32, #tpu.memory_space<vmem>>, %arg4: memref<8x72xf32, #tpu.memory_space<vmem>>, %arg5: memref<8x1xf32, #tpu.memory_space<vmem>>, %arg6: memref<1x8x256xf32, #tpu.memory_space<vmem>>) attributes {dimension_semantics = [#tpu.dimension_semantics<parallel>], iteration_bounds = array<i64: 2>, scalar_prefetch = 0 : i64, scratch_operands = 0 : i64, tpu.core_type = #tpu.core_type<tc>, window_params = [{transform_indices = @transform_0, window_bounds = array<i64: 1, 4, 256>}, {pipeline_mode = #tpu.pipeline_mode<synchronous>, transform_indices = @transform_1, window_bounds = array<i64: 8, 36>}, {pipeline_mode = #tpu.pipeline_mode<synchronous>, transform_indices = @transform_2, window_bounds = array<i64: 8, 1>}, {pipeline_mode = #tpu.pipeline_mode<synchronous>, transform_indices = @transform_3, window_bounds = array<i64: 8, 72>}, {pipeline_mode = #tpu.pipeline_mode<synchronous>, transform_indices = @transform_4, window_bounds = array<i64: 8, 1>}, {transform_indices = @transform_5, window_bounds = array<i64: 1, 8, 256>}]} {
    %0 = tpu.iota {dimensions = array<i32: 1>} : vector<1x256xi32>
    %c16_i32 = arith.constant 16 : i32
    %c0_i32 = arith.constant 0 : i32
    %1 = arith.cmpi eq, %c16_i32, %c0_i32 : i32
    %c1_i32 = arith.constant 1 : i32
    %2 = arith.select %1, %c1_i32, %c16_i32 : i32
    %3 = vector.broadcast %2 : i32 to vector<1x256xi32>
    %4 = arith.remsi %0, %3 : vector<1x256xi32>
    %c0_i32_0 = arith.constant 0 : i32
    %5 = vector.broadcast %c0_i32_0 : i32 to vector<1x256xi32>
    %6 = arith.cmpi ne, %4, %5 : vector<1x256xi32>
    %c0_i32_1 = arith.constant 0 : i32
    %7 = vector.broadcast %c0_i32_1 : i32 to vector<1x256xi32>
    %8 = arith.cmpi slt, %4, %7 : vector<1x256xi32>
    %c0_i32_2 = arith.constant 0 : i32
    %9 = arith.cmpi slt, %2, %c0_i32_2 : i32
    %10 = vector.broadcast %9 : i1 to vector<1x256xi1>
    %11 = vector.broadcast %10 : vector<1x256xi1> to vector<1x256xi1>
    %12 = arith.xori %8, %11 : vector<1x256xi1>
    %13 = arith.andi %12, %6 : vector<1x256xi1>
    %14 = vector.broadcast %2 : i32 to vector<1x256xi32>
    %15 = arith.addi %4, %14 : vector<1x256xi32>
    %16 = arith.select %13, %15, %4 : vector<1x256xi1>, vector<1x256xi32>
    %c0 = arith.constant 0 : index
    %c0_3 = arith.constant 0 : index
    %c0_4 = arith.constant 0 : index
    %17 = vector.load %arg1[%c0, %c0_3, %c0_4] : memref<1x4x256xf32, #tpu.memory_space<vmem>>, vector<1x4x256xf32>
    %18 = vector.shape_cast %17 : vector<1x4x256xf32> to vector<4x256xf32>
    %cst = arith.constant 0.000000e+00 : f32
    %19 = vector.broadcast %cst : f32 to vector<4x17xf32>
    %20 = tpu.concatenate %19, %18, %19 in 1 : vector<4x17xf32>, vector<4x256xf32>, vector<4x17xf32> -> vector<4x290xf32>
    %21 = arith.truncf %20 : vector<4x290xf32> to vector<4x290xbf16>
    %c0_5 = arith.constant 0 : index
    %c0_6 = arith.constant 0 : index
    %22 = vector.load %arg2[%c0_5, %c0_6] : memref<8x36xf32, #tpu.memory_space<vmem>>, vector<8x36xf32>
    %23 = arith.truncf %22 : vector<8x36xf32> to vector<8x36xbf16>
    %cst_7 = arith.constant 0.000000e+00 : f32
    %24 = vector.broadcast %cst_7 : f32 to vector<8x256xf32>
    %25 = vector.extract_strided_slice %21 {offsets = [0, 0], sizes = [4, 256], strides = [1, 1]} : vector<4x290xbf16> to vector<4x256xbf16>
    %c1_i32_8 = arith.constant 1 : i32
    %26 = vector.broadcast %c1_i32_8 : i32 to vector<1x256xi32>
    %27 = arith.cmpi sge, %16, %26 : vector<1x256xi32>
    %cst_9 = arith.constant 0.000000e+00 : bf16
    %28 = vector.broadcast %cst_9 : bf16 to vector<4x256xbf16>
    %29 = vector.shape_cast %27 : vector<1x256xi1> to vector<1x256xi1>
    %30 = vector.broadcast %29 : vector<1x256xi1> to vector<4x256xi1>
    %31 = arith.select %30, %25, %28 : vector<4x256xi1>, vector<4x256xbf16>
    %32 = vector.extract_strided_slice %23 {offsets = [0, 0], sizes = [8, 4], strides = [1, 1]} : vector<8x36xbf16> to vector<8x4xbf16>
    %cst_10 = arith.constant dense<0.000000e+00> : vector<8x256xf32>
    %33 = tpu.matmul %32, %31, %cst_10 {dimension_numbers = #tpu.dot_dimension_numbers<[1], [0], [0], [1], [0, 0, 1, 1], [], []>} : vector<8x4xbf16>, vector<4x256xbf16>, vector<8x256xf32> -> vector<8x256xf32>
    %34 = arith.addf %24, %33 : vector<8x256xf32>
    %35 = vector.extract_strided_slice %21 {offsets = [0, 1], sizes = [4, 256], strides = [1, 1]} : vector<4x290xbf16> to vector<4x256xbf16>
    %36 = vector.extract_strided_slice %23 {offsets = [0, 4], sizes = [8, 4], strides = [1, 1]} : vector<8x36xbf16> to vector<8x4xbf16>
    %cst_11 = arith.constant dense<0.000000e+00> : vector<8x256xf32>
    %37 = tpu.matmul %36, %35, %cst_11 {dimension_numbers = #tpu.dot_dimension_numbers<[1], [0], [0], [1], [0, 0, 1, 1], [], []>} : vector<8x4xbf16>, vector<4x256xbf16>, vector<8x256xf32> -> vector<8x256xf32>
    %38 = arith.addf %34, %37 : vector<8x256xf32>
    %39 = vector.extract_strided_slice %21 {offsets = [0, 2], sizes = [4, 256], strides = [1, 1]} : vector<4x290xbf16> to vector<4x256xbf16>
    %c15_i32 = arith.constant 15 : i32
    %40 = vector.broadcast %c15_i32 : i32 to vector<1x256xi32>
    %41 = arith.cmpi slt, %16, %40 : vector<1x256xi32>
    %cst_12 = arith.constant 0.000000e+00 : bf16
    %42 = vector.broadcast %cst_12 : bf16 to vector<4x256xbf16>
    %43 = vector.shape_cast %41 : vector<1x256xi1> to vector<1x256xi1>
    %44 = vector.broadcast %43 : vector<1x256xi1> to vector<4x256xi1>
    %45 = arith.select %44, %39, %42 : vector<4x256xi1>, vector<4x256xbf16>
    %46 = vector.extract_strided_slice %23 {offsets = [0, 8], sizes = [8, 4], strides = [1, 1]} : vector<8x36xbf16> to vector<8x4xbf16>
    %cst_13 = arith.constant dense<0.000000e+00> : vector<8x256xf32>
    %47 = tpu.matmul %46, %45, %cst_13 {dimension_numbers = #tpu.dot_dimension_numbers<[1], [0], [0], [1], [0, 0, 1, 1], [], []>} : vector<8x4xbf16>, vector<4x256xbf16>, vector<8x256xf32> -> vector<8x256xf32>
    %48 = arith.addf %38, %47 : vector<8x256xf32>
    %49 = vector.extract_strided_slice %21 {offsets = [0, 16], sizes = [4, 256], strides = [1, 1]} : vector<4x290xbf16> to vector<4x256xbf16>
    %c1_i32_14 = arith.constant 1 : i32
    %50 = vector.broadcast %c1_i32_14 : i32 to vector<1x256xi32>
    %51 = arith.cmpi sge, %16, %50 : vector<1x256xi32>
    %cst_15 = arith.constant 0.000000e+00 : bf16
    %52 = vector.broadcast %cst_15 : bf16 to vector<4x256xbf16>
    %53 = vector.shape_cast %51 : vector<1x256xi1> to vector<1x256xi1>
    %54 = vector.broadcast %53 : vector<1x256xi1> to vector<4x256xi1>
    %55 = arith.select %54, %49, %52 : vector<4x256xi1>, vector<4x256xbf16>
    %56 = vector.extract_strided_slice %23 {offsets = [0, 12], sizes = [8, 4], strides = [1, 1]} : vector<8x36xbf16> to vector<8x4xbf16>
    %cst_16 = arith.constant dense<0.000000e+00> : vector<8x256xf32>
    %57 = tpu.matmul %56, %55, %cst_16 {dimension_numbers = #tpu.dot_dimension_numbers<[1], [0], [0], [1], [0, 0, 1, 1], [], []>} : vector<8x4xbf16>, vector<4x256xbf16>, vector<8x256xf32> -> vector<8x256xf32>
    %58 = arith.addf %48, %57 : vector<8x256xf32>
    %59 = vector.extract_strided_slice %21 {offsets = [0, 17], sizes = [4, 256], strides = [1, 1]} : vector<4x290xbf16> to vector<4x256xbf16>
    %60 = vector.extract_strided_slice %23 {offsets = [0, 16], sizes = [8, 4], strides = [1, 1]} : vector<8x36xbf16> to vector<8x4xbf16>
    %cst_17 = arith.constant dense<0.000000e+00> : vector<8x256xf32>
    %61 = tpu.matmul %60, %59, %cst_17 {dimension_numbers = #tpu.dot_dimension_numbers<[1], [0], [0], [1], [0, 0, 1, 1], [], []>} : vector<8x4xbf16>, vector<4x256xbf16>, vector<8x256xf32> -> vector<8x256xf32>
    %62 = arith.addf %58, %61 : vector<8x256xf32>
    %63 = vector.extract_strided_slice %21 {offsets = [0, 18], sizes = [4, 256], strides = [1, 1]} : vector<4x290xbf16> to vector<4x256xbf16>
    %c15_i32_18 = arith.constant 15 : i32
    %64 = vector.broadcast %c15_i32_18 : i32 to vector<1x256xi32>
    %65 = arith.cmpi slt, %16, %64 : vector<1x256xi32>
    %cst_19 = arith.constant 0.000000e+00 : bf16
    %66 = vector.broadcast %cst_19 : bf16 to vector<4x256xbf16>
    %67 = vector.shape_cast %65 : vector<1x256xi1> to vector<1x256xi1>
    %68 = vector.broadcast %67 : vector<1x256xi1> to vector<4x256xi1>
    %69 = arith.select %68, %63, %66 : vector<4x256xi1>, vector<4x256xbf16>
    %70 = vector.extract_strided_slice %23 {offsets = [0, 20], sizes = [8, 4], strides = [1, 1]} : vector<8x36xbf16> to vector<8x4xbf16>
    %cst_20 = arith.constant dense<0.000000e+00> : vector<8x256xf32>
    %71 = tpu.matmul %70, %69, %cst_20 {dimension_numbers = #tpu.dot_dimension_numbers<[1], [0], [0], [1], [0, 0, 1, 1], [], []>} : vector<8x4xbf16>, vector<4x256xbf16>, vector<8x256xf32> -> vector<8x256xf32>
    %72 = arith.addf %62, %71 : vector<8x256xf32>
    %73 = vector.extract_strided_slice %21 {offsets = [0, 32], sizes = [4, 256], strides = [1, 1]} : vector<4x290xbf16> to vector<4x256xbf16>
    %c1_i32_21 = arith.constant 1 : i32
    %74 = vector.broadcast %c1_i32_21 : i32 to vector<1x256xi32>
    %75 = arith.cmpi sge, %16, %74 : vector<1x256xi32>
    %cst_22 = arith.constant 0.000000e+00 : bf16
    %76 = vector.broadcast %cst_22 : bf16 to vector<4x256xbf16>
    %77 = vector.shape_cast %75 : vector<1x256xi1> to vector<1x256xi1>
    %78 = vector.broadcast %77 : vector<1x256xi1> to vector<4x256xi1>
    %79 = arith.select %78, %73, %76 : vector<4x256xi1>, vector<4x256xbf16>
    %80 = vector.extract_strided_slice %23 {offsets = [0, 24], sizes = [8, 4], strides = [1, 1]} : vector<8x36xbf16> to vector<8x4xbf16>
    %cst_23 = arith.constant dense<0.000000e+00> : vector<8x256xf32>
    %81 = tpu.matmul %80, %79, %cst_23 {dimension_numbers = #tpu.dot_dimension_numbers<[1], [0], [0], [1], [0, 0, 1, 1], [], []>} : vector<8x4xbf16>, vector<4x256xbf16>, vector<8x256xf32> -> vector<8x256xf32>
    %82 = arith.addf %72, %81 : vector<8x256xf32>
    %83 = vector.extract_strided_slice %21 {offsets = [0, 33], sizes = [4, 256], strides = [1, 1]} : vector<4x290xbf16> to vector<4x256xbf16>
    %84 = vector.extract_strided_slice %23 {offsets = [0, 28], sizes = [8, 4], strides = [1, 1]} : vector<8x36xbf16> to vector<8x4xbf16>
    %cst_24 = arith.constant dense<0.000000e+00> : vector<8x256xf32>
    %85 = tpu.matmul %84, %83, %cst_24 {dimension_numbers = #tpu.dot_dimension_numbers<[1], [0], [0], [1], [0, 0, 1, 1], [], []>} : vector<8x4xbf16>, vector<4x256xbf16>, vector<8x256xf32> -> vector<8x256xf32>
    %86 = arith.addf %82, %85 : vector<8x256xf32>
    %87 = vector.extract_strided_slice %21 {offsets = [0, 34], sizes = [4, 256], strides = [1, 1]} : vector<4x290xbf16> to vector<4x256xbf16>
    %c15_i32_25 = arith.constant 15 : i32
    %88 = vector.broadcast %c15_i32_25 : i32 to vector<1x256xi32>
    %89 = arith.cmpi slt, %16, %88 : vector<1x256xi32>
    %cst_26 = arith.constant 0.000000e+00 : bf16
    %90 = vector.broadcast %cst_26 : bf16 to vector<4x256xbf16>
    %91 = vector.shape_cast %89 : vector<1x256xi1> to vector<1x256xi1>
    %92 = vector.broadcast %91 : vector<1x256xi1> to vector<4x256xi1>
    %93 = arith.select %92, %87, %90 : vector<4x256xi1>, vector<4x256xbf16>
    %94 = vector.extract_strided_slice %23 {offsets = [0, 32], sizes = [8, 4], strides = [1, 1]} : vector<8x36xbf16> to vector<8x4xbf16>
    %cst_27 = arith.constant dense<0.000000e+00> : vector<8x256xf32>
    %95 = tpu.matmul %94, %93, %cst_27 {dimension_numbers = #tpu.dot_dimension_numbers<[1], [0], [0], [1], [0, 0, 1, 1], [], []>} : vector<8x4xbf16>, vector<4x256xbf16>, vector<8x256xf32> -> vector<8x256xf32>
    %96 = arith.addf %86, %95 : vector<8x256xf32>
    %c0_28 = arith.constant 0 : index
    %c0_29 = arith.constant 0 : index
    %97 = vector.load %arg3[%c0_28, %c0_29] : memref<8x1xf32, #tpu.memory_space<vmem>>, vector<8x1xf32>
    %98 = vector.broadcast %97 : vector<8x1xf32> to vector<8x256xf32>
    %99 = arith.addf %96, %98 : vector<8x256xf32>
    %cst_30 = arith.constant 0.000000e+00 : f32
    %100 = vector.broadcast %cst_30 : f32 to vector<8x256xf32>
    %101 = arith.cmpf oge, %99, %100 : vector<8x256xf32>
    %cst_31 = arith.constant 1.000000e-01 : f32
    %102 = vector.broadcast %cst_31 : f32 to vector<8x256xf32>
    %103 = arith.mulf %102, %99 : vector<8x256xf32>
    %104 = arith.select %101, %99, %103 : vector<8x256xi1>, vector<8x256xf32>
    %cst_32 = arith.constant 0.000000e+00 : f32
    %105 = vector.broadcast %cst_32 : f32 to vector<8x17xf32>
    %106 = tpu.concatenate %105, %104, %105 in 1 : vector<8x17xf32>, vector<8x256xf32>, vector<8x17xf32> -> vector<8x290xf32>
    %107 = arith.truncf %106 : vector<8x290xf32> to vector<8x290xbf16>
    %c0_33 = arith.constant 0 : index
    %c0_34 = arith.constant 0 : index
    %108 = vector.load %arg4[%c0_33, %c0_34] : memref<8x72xf32, #tpu.memory_space<vmem>>, vector<8x72xf32>
    %109 = arith.truncf %108 : vector<8x72xf32> to vector<8x72xbf16>
    %cst_35 = arith.constant 0.000000e+00 : f32
    %110 = vector.broadcast %cst_35 : f32 to vector<8x256xf32>
    %111 = vector.extract_strided_slice %107 {offsets = [0, 0], sizes = [8, 256], strides = [1, 1]} : vector<8x290xbf16> to vector<8x256xbf16>
    %c1_i32_36 = arith.constant 1 : i32
    %112 = vector.broadcast %c1_i32_36 : i32 to vector<1x256xi32>
    %113 = arith.cmpi sge, %16, %112 : vector<1x256xi32>
    %cst_37 = arith.constant 0.000000e+00 : bf16
    %114 = vector.broadcast %cst_37 : bf16 to vector<8x256xbf16>
    %115 = vector.shape_cast %113 : vector<1x256xi1> to vector<1x256xi1>
    %116 = vector.broadcast %115 : vector<1x256xi1> to vector<8x256xi1>
    %117 = arith.select %116, %111, %114 : vector<8x256xi1>, vector<8x256xbf16>
    %118 = vector.extract_strided_slice %109 {offsets = [0, 0], sizes = [8, 8], strides = [1, 1]} : vector<8x72xbf16> to vector<8x8xbf16>
    %cst_38 = arith.constant dense<0.000000e+00> : vector<8x256xf32>
    %119 = tpu.matmul %118, %117, %cst_38 {dimension_numbers = #tpu.dot_dimension_numbers<[1], [0], [0], [1], [0, 0, 1, 1], [], []>} : vector<8x8xbf16>, vector<8x256xbf16>, vector<8x256xf32> -> vector<8x256xf32>
    %120 = arith.addf %110, %119 : vector<8x256xf32>
    %121 = vector.extract_strided_slice %107 {offsets = [0, 1], sizes = [8, 256], strides = [1, 1]} : vector<8x290xbf16> to vector<8x256xbf16>
    %122 = vector.extract_strided_slice %109 {offsets = [0, 8], sizes = [8, 8], strides = [1, 1]} : vector<8x72xbf16> to vector<8x8xbf16>
    %cst_39 = arith.constant dense<0.000000e+00> : vector<8x256xf32>
    %123 = tpu.matmul %122, %121, %cst_39 {dimension_numbers = #tpu.dot_dimension_numbers<[1], [0], [0], [1], [0, 0, 1, 1], [], []>} : vector<8x8xbf16>, vector<8x256xbf16>, vector<8x256xf32> -> vector<8x256xf32>
    %124 = arith.addf %120, %123 : vector<8x256xf32>
    %125 = vector.extract_strided_slice %107 {offsets = [0, 2], sizes = [8, 256], strides = [1, 1]} : vector<8x290xbf16> to vector<8x256xbf16>
    %c15_i32_40 = arith.constant 15 : i32
    %126 = vector.broadcast %c15_i32_40 : i32 to vector<1x256xi32>
    %127 = arith.cmpi slt, %16, %126 : vector<1x256xi32>
    %cst_41 = arith.constant 0.000000e+00 : bf16
    %128 = vector.broadcast %cst_41 : bf16 to vector<8x256xbf16>
    %129 = vector.shape_cast %127 : vector<1x256xi1> to vector<1x256xi1>
    %130 = vector.broadcast %129 : vector<1x256xi1> to vector<8x256xi1>
    %131 = arith.select %130, %125, %128 : vector<8x256xi1>, vector<8x256xbf16>
    %132 = vector.extract_strided_slice %109 {offsets = [0, 16], sizes = [8, 8], strides = [1, 1]} : vector<8x72xbf16> to vector<8x8xbf16>
    %cst_42 = arith.constant dense<0.000000e+00> : vector<8x256xf32>
    %133 = tpu.matmul %132, %131, %cst_42 {dimension_numbers = #tpu.dot_dimension_numbers<[1], [0], [0], [1], [0, 0, 1, 1], [], []>} : vector<8x8xbf16>, vector<8x256xbf16>, vector<8x256xf32> -> vector<8x256xf32>
    %134 = arith.addf %124, %133 : vector<8x256xf32>
    %135 = vector.extract_strided_slice %107 {offsets = [0, 16], sizes = [8, 256], strides = [1, 1]} : vector<8x290xbf16> to vector<8x256xbf16>
    %c1_i32_43 = arith.constant 1 : i32
    %136 = vector.broadcast %c1_i32_43 : i32 to vector<1x256xi32>
    %137 = arith.cmpi sge, %16, %136 : vector<1x256xi32>
    %cst_44 = arith.constant 0.000000e+00 : bf16
    %138 = vector.broadcast %cst_44 : bf16 to vector<8x256xbf16>
    %139 = vector.shape_cast %137 : vector<1x256xi1> to vector<1x256xi1>
    %140 = vector.broadcast %139 : vector<1x256xi1> to vector<8x256xi1>
    %141 = arith.select %140, %135, %138 : vector<8x256xi1>, vector<8x256xbf16>
    %142 = vector.extract_strided_slice %109 {offsets = [0, 24], sizes = [8, 8], strides = [1, 1]} : vector<8x72xbf16> to vector<8x8xbf16>
    %cst_45 = arith.constant dense<0.000000e+00> : vector<8x256xf32>
    %143 = tpu.matmul %142, %141, %cst_45 {dimension_numbers = #tpu.dot_dimension_numbers<[1], [0], [0], [1], [0, 0, 1, 1], [], []>} : vector<8x8xbf16>, vector<8x256xbf16>, vector<8x256xf32> -> vector<8x256xf32>
    %144 = arith.addf %134, %143 : vector<8x256xf32>
    %145 = vector.extract_strided_slice %107 {offsets = [0, 17], sizes = [8, 256], strides = [1, 1]} : vector<8x290xbf16> to vector<8x256xbf16>
    %146 = vector.extract_strided_slice %109 {offsets = [0, 32], sizes = [8, 8], strides = [1, 1]} : vector<8x72xbf16> to vector<8x8xbf16>
    %cst_46 = arith.constant dense<0.000000e+00> : vector<8x256xf32>
    %147 = tpu.matmul %146, %145, %cst_46 {dimension_numbers = #tpu.dot_dimension_numbers<[1], [0], [0], [1], [0, 0, 1, 1], [], []>} : vector<8x8xbf16>, vector<8x256xbf16>, vector<8x256xf32> -> vector<8x256xf32>
    %148 = arith.addf %144, %147 : vector<8x256xf32>
    %149 = vector.extract_strided_slice %107 {offsets = [0, 18], sizes = [8, 256], strides = [1, 1]} : vector<8x290xbf16> to vector<8x256xbf16>
    %c15_i32_47 = arith.constant 15 : i32
    %150 = vector.broadcast %c15_i32_47 : i32 to vector<1x256xi32>
    %151 = arith.cmpi slt, %16, %150 : vector<1x256xi32>
    %cst_48 = arith.constant 0.000000e+00 : bf16
    %152 = vector.broadcast %cst_48 : bf16 to vector<8x256xbf16>
    %153 = vector.shape_cast %151 : vector<1x256xi1> to vector<1x256xi1>
    %154 = vector.broadcast %153 : vector<1x256xi1> to vector<8x256xi1>
    %155 = arith.select %154, %149, %152 : vector<8x256xi1>, vector<8x256xbf16>
    %156 = vector.extract_strided_slice %109 {offsets = [0, 40], sizes = [8, 8], strides = [1, 1]} : vector<8x72xbf16> to vector<8x8xbf16>
    %cst_49 = arith.constant dense<0.000000e+00> : vector<8x256xf32>
    %157 = tpu.matmul %156, %155, %cst_49 {dimension_numbers = #tpu.dot_dimension_numbers<[1], [0], [0], [1], [0, 0, 1, 1], [], []>} : vector<8x8xbf16>, vector<8x256xbf16>, vector<8x256xf32> -> vector<8x256xf32>
    %158 = arith.addf %148, %157 : vector<8x256xf32>
    %159 = vector.extract_strided_slice %107 {offsets = [0, 32], sizes = [8, 256], strides = [1, 1]} : vector<8x290xbf16> to vector<8x256xbf16>
    %c1_i32_50 = arith.constant 1 : i32
    %160 = vector.broadcast %c1_i32_50 : i32 to vector<1x256xi32>
    %161 = arith.cmpi sge, %16, %160 : vector<1x256xi32>
    %cst_51 = arith.constant 0.000000e+00 : bf16
    %162 = vector.broadcast %cst_51 : bf16 to vector<8x256xbf16>
    %163 = vector.shape_cast %161 : vector<1x256xi1> to vector<1x256xi1>
    %164 = vector.broadcast %163 : vector<1x256xi1> to vector<8x256xi1>
    %165 = arith.select %164, %159, %162 : vector<8x256xi1>, vector<8x256xbf16>
    %166 = vector.extract_strided_slice %109 {offsets = [0, 48], sizes = [8, 8], strides = [1, 1]} : vector<8x72xbf16> to vector<8x8xbf16>
    %cst_52 = arith.constant dense<0.000000e+00> : vector<8x256xf32>
    %167 = tpu.matmul %166, %165, %cst_52 {dimension_numbers = #tpu.dot_dimension_numbers<[1], [0], [0], [1], [0, 0, 1, 1], [], []>} : vector<8x8xbf16>, vector<8x256xbf16>, vector<8x256xf32> -> vector<8x256xf32>
    %168 = arith.addf %158, %167 : vector<8x256xf32>
    %169 = vector.extract_strided_slice %107 {offsets = [0, 33], sizes = [8, 256], strides = [1, 1]} : vector<8x290xbf16> to vector<8x256xbf16>
    %170 = vector.extract_strided_slice %109 {offsets = [0, 56], sizes = [8, 8], strides = [1, 1]} : vector<8x72xbf16> to vector<8x8xbf16>
    %cst_53 = arith.constant dense<0.000000e+00> : vector<8x256xf32>
    %171 = tpu.matmul %170, %169, %cst_53 {dimension_numbers = #tpu.dot_dimension_numbers<[1], [0], [0], [1], [0, 0, 1, 1], [], []>} : vector<8x8xbf16>, vector<8x256xbf16>, vector<8x256xf32> -> vector<8x256xf32>
    %172 = arith.addf %168, %171 : vector<8x256xf32>
    %173 = vector.extract_strided_slice %107 {offsets = [0, 34], sizes = [8, 256], strides = [1, 1]} : vector<8x290xbf16> to vector<8x256xbf16>
    %c15_i32_54 = arith.constant 15 : i32
    %174 = vector.broadcast %c15_i32_54 : i32 to vector<1x256xi32>
    %175 = arith.cmpi slt, %16, %174 : vector<1x256xi32>
    %cst_55 = arith.constant 0.000000e+00 : bf16
    %176 = vector.broadcast %cst_55 : bf16 to vector<8x256xbf16>
    %177 = vector.shape_cast %175 : vector<1x256xi1> to vector<1x256xi1>
    %178 = vector.broadcast %177 : vector<1x256xi1> to vector<8x256xi1>
    %179 = arith.select %178, %173, %176 : vector<8x256xi1>, vector<8x256xbf16>
    %180 = vector.extract_strided_slice %109 {offsets = [0, 64], sizes = [8, 8], strides = [1, 1]} : vector<8x72xbf16> to vector<8x8xbf16>
    %cst_56 = arith.constant dense<0.000000e+00> : vector<8x256xf32>
    %181 = tpu.matmul %180, %179, %cst_56 {dimension_numbers = #tpu.dot_dimension_numbers<[1], [0], [0], [1], [0, 0, 1, 1], [], []>} : vector<8x8xbf16>, vector<8x256xbf16>, vector<8x256xf32> -> vector<8x256xf32>
    %182 = arith.addf %172, %181 : vector<8x256xf32>
    %c0_57 = arith.constant 0 : index
    %c0_58 = arith.constant 0 : index
    %183 = vector.load %arg5[%c0_57, %c0_58] : memref<8x1xf32, #tpu.memory_space<vmem>>, vector<8x1xf32>
    %184 = vector.broadcast %183 : vector<8x1xf32> to vector<8x256xf32>
    %185 = arith.addf %182, %184 : vector<8x256xf32>
    %cst_59 = arith.constant 0.000000e+00 : f32
    %186 = vector.broadcast %cst_59 : f32 to vector<8x256xf32>
    %187 = arith.cmpf oge, %185, %186 : vector<8x256xf32>
    %cst_60 = arith.constant 1.000000e-01 : f32
    %188 = vector.broadcast %cst_60 : f32 to vector<8x256xf32>
    %189 = arith.mulf %188, %185 : vector<8x256xf32>
    %190 = arith.select %187, %185, %189 : vector<8x256xi1>, vector<8x256xf32>
    %c0_61 = arith.constant 0 : index
    %c0_62 = arith.constant 0 : index
    %c0_63 = arith.constant 0 : index
    %191 = vector.load %arg6[%c0_61, %c0_62, %c0_63] : memref<1x8x256xf32, #tpu.memory_space<vmem>>, vector<1x8x256xf32>
    %192 = vector.shape_cast %191 : vector<1x8x256xf32> to vector<8x256xf32>
    %193 = vector.shape_cast %190 : vector<8x256xf32> to vector<1x8x256xf32>
    tpu.vector_store %arg6[%c0_61, %c0_62, %c0_63], %193 {strides = array<i32>} : memref<1x8x256xf32, #tpu.memory_space<vmem>>, vector<1x8x256xf32>,
    return
  }
  func.func @transform_0(%arg0: i32) -> (i32, i32, i32) {
    %c0_i32 = arith.constant 0 : i32
    %c0_i32_0 = arith.constant 0 : i32
    %c0_i32_1 = arith.constant 0 : i32
    return %arg0, %c0_i32, %c0_i32_0 : i32, i32, i32
  }
  func.func @transform_1(%arg0: i32) -> (i32, i32) {
    %c0_i32 = arith.constant 0 : i32
    %c0_i32_0 = arith.constant 0 : i32
    %c0_i32_1 = arith.constant 0 : i32
    return %c0_i32, %c0_i32_0 : i32, i32
  }
  func.func @transform_2(%arg0: i32) -> (i32, i32) {
    %c0_i32 = arith.constant 0 : i32
    %c0_i32_0 = arith.constant 0 : i32
    %c0_i32_1 = arith.constant 0 : i32
    return %c0_i32, %c0_i32_0 : i32, i32
  }
  func.func @transform_3(%arg0: i32) -> (i32, i32) {
    %c0_i32 = arith.constant 0 : i32
    %c0_i32_0 = arith.constant 0 : i32
    %c0_i32_1 = arith.constant 0 : i32
    return %c0_i32, %c0_i32_0 : i32, i32
  }
  func.func @transform_4(%arg0: i32) -> (i32, i32) {
    %c0_i32 = arith.constant 0 : i32
    %c0_i32_0 = arith.constant 0 : i32
    %c0_i32_1 = arith.constant 0 : i32
    return %c0_i32, %c0_i32_0 : i32, i32
  }
  func.func @transform_5(%arg0: i32) -> (i32, i32, i32) {
    %c0_i32 = arith.constant 0 : i32
    %c0_i32_0 = arith.constant 0 : i32
    %c0_i32_1 = arith.constant 0 : i32
    return %arg0, %c0_i32, %c0_i32_0 : i32, i32, i32
  }
}

</mosaic_0001>

<llo_original>
// kernel: tpu_custom_call.1
$region0: #{tpu_custom_call.1}
  #allocation0 [shape = 'u32[]', space=smem, size = 0x4, offset = 0x4, fixed_abs, tag = 'smem constant byte address 0x4 - core index']
  #allocation1 [shape = 'u32[144,128]{1,0:T(1,128)}', space=vmem, size = 0x12000, scoped, tag = 'internal scratch']
  %s0 = inlined_call_operand.vmem [shape: f32[2,4,256], index: 0, kind: input, shape index: {}]
  %s1 = inlined_call_operand.hbm [shape: f32[8,36], index: 1, kind: input, shape index: {}]
  %s2 = inlined_call_operand.vmem [shape: f32[8,1], index: 2, kind: input, shape index: {}]
  %s3 = inlined_call_operand.vmem [shape: f32[8,72], index: 3, kind: input, shape index: {}]
  %s4 = inlined_call_operand.vmem [shape: f32[8,1], index: 4, kind: input, shape index: {}]
  %s5 = inlined_call_operand.hbm [shape: f32[2,8,256], index: 5, kind: output, shape index: {}]
  %s6 = sld [smem:[#allocation0]]
  $region57: #{tpu_custom_call.1} parent=0
    _
  %s8 = ssub.s32 1, %s6
  %s9 = scalar_select 0, %s8, %s6
  $region1: #{tpu_custom_call.1} parent=0
    #allocation2 [shape = 'u8[4096]{0}', space=vmem, size = 0x1000, scoped, tag = 'input window, operand 1, single buffered']
    #allocation3 [shape = 's32[2]{0}', space=sflag, size = 0x8, scoped, tag = 'scoped memory for tpu_custom_call.1']
    #allocation4 [shape = 's32[2]{0}', space=sflag, size = 0x8, scoped, tag = 'scoped memory for tpu_custom_call.1']
    #allocation5 [shape = 'u8[16384]{0}', space=vmem, size = 0x4000, scoped, tag = 'output window, operand 0']
    %10 = vsyncpa [#allocation3], 0
    %11 = vsyncpa [#allocation4], 0
    %s12 = scalar_lea.sflag [#allocation4], 1
    %13 = vsyncpa %s12, 0
    loop: start=0, step=1, limit=4
    $region2: #{tpu_custom_call.1} parent=1 // loop_pre_header
      _
    $region3: #{tpu_custom_call.1} parent=1 // loop_header
      %s15 = sphi 0, %s19
      %p16 = scmp.ge.s32.totalorder %s15, 4
      %s25 = sphi 0, %s27
      %s28 = sphi 0, %s25
      %s29 = sphi 0, %s28
      %s45 = sphi 0, %s29
      %s49 = sphi 0, %s49
      %s51 = sphi 0, %s49
      %s52 = sphi 0, %s51
      %s66 = sphi 0, %s52
      %s70 = sphi 0, %s70
      %s72 = sphi 0, %s70
      %s73 = sphi 0, %s72
      %s87 = sphi 0, %s73
      %s91 = sphi 0, %s91
      %s93 = sphi 0, %s91
      %s94 = sphi 0, %s93
      %s108 = sphi 0, %s94
      %s112 = sphi 0, %s112
      %s114 = sphi 0, %s112
      %s115 = sphi 0, %s114
      %s129 = sphi 0, %s115
      %s135 = sphi 0, %s137
      %s138 = sphi 0, %s135
      %s139 = sphi 0, %s138
      %s155 = sphi 0, %s139
    $region4: #{tpu_custom_call.1} parent=1 // loop_header_branch
      %18 = sbr.rel (%p16) target = $region8
    $region5: #{tpu_custom_call.1} parent=1 // loop_body
      %s20 = ssub.s32 %s15, 1
      %s21 = ssub.s32 %s15, 2
      %s22 = sadd.s32 %s15, 1
      %s23 = ssub.s32 %s15, %s22
      %p24 = scmp.eq.s32.totalorder %s23, 0
      %s26 = sadd.s32 %s25, 1
      %s27 = scalar_select %p24, %s25, %s26
      %p30 = pneg %p24
      %p31 = scmp.eq.s32.totalorder %s15, 1
      %p32 = por %p30, %p31
      %p33 = scmp.ne.s32.totalorder %s25, %s28
      %p34 = scmp.eq.s32.totalorder %s15, 0
      %p35 = por %p33, %p34
      %p36 = scmp.ne.s32.totalorder %s25, %s28
      %p37 = scmp.eq.s32.totalorder %s20, 1
      %p38 = por %p36, %p37
      %p39 = scmp.ne.s32.totalorder %s28, %s29
      %p40 = scmp.eq.s32.totalorder %s20, 0
      %p41 = por %p39, %p40
      %p42 = scmp.ne.s32.totalorder %s28, %s29
      %p43 = scmp.eq.s32.totalorder %s21, 1
      %p44 = por %p42, %p43
      %p46 = scmp.ne.s32.totalorder %s29, %s45
      %p47 = scmp.eq.s32.totalorder %s21, 0
      %p48 = por %p46, %p47
      %s50 = sadd.s32 %s49, 1
      %p53 = scmp.eq.s32.totalorder %s15, 1
      %p54 = scmp.ne.s32.totalorder %s49, %s51
      %p55 = scmp.eq.s32.totalorder %s15, 0
      %p56 = por %p54, %p55
      %p57 = scmp.ne.s32.totalorder %s49, %s51
      %p58 = scmp.eq.s32.totalorder %s20, 1
      %p59 = por %p57, %p58
      %p60 = scmp.ne.s32.totalorder %s51, %s52
      %p61 = scmp.eq.s32.totalorder %s20, 0
      %p62 = por %p60, %p61
      %p63 = scmp.ne.s32.totalorder %s51, %s52
      %p64 = scmp.eq.s32.totalorder %s21, 1
      %p65 = por %p63, %p64
      %p67 = scmp.ne.s32.totalorder %s52, %s66
      %p68 = scmp.eq.s32.totalorder %s21, 0
      %p69 = por %p67, %p68
      %s71 = sadd.s32 %s70, 1
      %p74 = scmp.eq.s32.totalorder %s15, 1
      %p75 = scmp.ne.s32.totalorder %s70, %s72
      %p76 = scmp.eq.s32.totalorder %s15, 0
      %p77 = por %p75, %p76
      %p78 = scmp.ne.s32.totalorder %s70, %s72
      %p79 = scmp.eq.s32.totalorder %s20, 1
      %p80 = por %p78, %p79
      %p81 = scmp.ne.s32.totalorder %s72, %s73
      %p82 = scmp.eq.s32.totalorder %s20, 0
      %p83 = por %p81, %p82
      %p84 = scmp.ne.s32.totalorder %s72, %s73
      %p85 = scmp.eq.s32.totalorder %s21, 1
      %p86 = por %p84, %p85
      %p88 = scmp.ne.s32.totalorder %s73, %s87
      %p89 = scmp.eq.s32.totalorder %s21, 0
      %p90 = por %p88, %p89
      %s92 = sadd.s32 %s91, 1
      %p95 = scmp.eq.s32.totalorder %s15, 1
      %p96 = scmp.ne.s32.totalorder %s91, %s93
      %p97 = scmp.eq.s32.totalorder %s15, 0
      %p98 = por %p96, %p97
      %p99 = scmp.ne.s32.totalorder %s91, %s93
      %p100 = scmp.eq.s32.totalorder %s20, 1
      %p101 = por %p99, %p100
      %p102 = scmp.ne.s32.totalorder %s93, %s94
      %p103 = scmp.eq.s32.totalorder %s20, 0
      %p104 = por %p102, %p103
      %p105 = scmp.ne.s32.totalorder %s93, %s94
      %p106 = scmp.eq.s32.totalorder %s21, 1
      %p107 = por %p105, %p106
      %p109 = scmp.ne.s32.totalorder %s94, %s108
      %p110 = scmp.eq.s32.totalorder %s21, 0
      %p111 = por %p109, %p110
      %s113 = sadd.s32 %s112, 1
      %p116 = scmp.eq.s32.totalorder %s15, 1
      %p117 = scmp.ne.s32.totalorder %s112, %s114
      %p118 = scmp.eq.s32.totalorder %s15, 0
      %p119 = por %p117, %p118
      %p120 = scmp.ne.s32.totalorder %s112, %s114
      %p121 = scmp.eq.s32.totalorder %s20, 1
      %p122 = por %p120, %p121
      %p123 = scmp.ne.s32.totalorder %s114, %s115
      %p124 = scmp.eq.s32.totalorder %s20, 0
      %p125 = por %p123, %p124
      %p126 = scmp.ne.s32.totalorder %s114, %s115
      %p127 = scmp.eq.s32.totalorder %s21, 1
      %p128 = por %p126, %p127
      %p130 = scmp.ne.s32.totalorder %s115, %s129
      %p131 = scmp.eq.s32.totalorder %s21, 0
      %p132 = por %p130, %p131
      %s133 = ssub.s32 %s15, %s22
      %p134 = scmp.eq.s32.totalorder %s133, 0
      %s136 = sadd.s32 %s135, 1
      %s137 = scalar_select %p134, %s135, %s136
      %p140 = pneg %p134
      %p141 = scmp.eq.s32.totalorder %s15, 1
      %p142 = por %p140, %p141
      %p143 = scmp.ne.s32.totalorder %s135, %s138
      %p144 = scmp.eq.s32.totalorder %s15, 0
      %p145 = por %p143, %p144
      %p146 = scmp.ne.s32.totalorder %s135, %s138
      %p147 = scmp.eq.s32.totalorder %s20, 1
      %p148 = por %p146, %p147
      %p149 = scmp.ne.s32.totalorder %s138, %s139
      %p150 = scmp.eq.s32.totalorder %s20, 0
      %p151 = por %p149, %p150
      %p152 = scmp.ne.s32.totalorder %s138, %s139
      %p153 = scmp.eq.s32.totalorder %s21, 1
      %p154 = por %p152, %p153
      %p156 = scmp.ne.s32.totalorder %s139, %s155
      %p157 = scmp.eq.s32.totalorder %s21, 0
      %p158 = por %p156, %p157
      %p159 = scmp.le.s32.totalorder 1, %s15
      %p160 = scmp.lt.s32.totalorder %s15, 3
      %p161 = pnand %p159, %p160
      %p162 = pneg %p161
      // Predicated region
      $region9: #{tpu_custom_call.1} parent=5 // pred_check
        _
      $region10: #{tpu_custom_call.1} parent=5 // pred_check_branch
        %164 = sbr.rel (%p161) target = $region12
      $region11: #{tpu_custom_call.1} parent=5 // pred_region
        %s165 = ssub.s32 %s15, 1
        // Predicated region
        $region13: #{tpu_custom_call.1} parent=11 // pred_check
          %p166 = pneg %p62
        $region14: #{tpu_custom_call.1} parent=11 // pred_check_branch
          %168 = sbr.rel (%p166) target = $region16
        $region15: #{tpu_custom_call.1} parent=11 // pred_region
          %s170 = ssub.s32 128, 128
          %171 = vsyncadd [#allocation3], %s170
          %s173 = sshll.u32 [#allocation2], 4
          %s174 = int_to_ptr.vmem [resolvable:$true] %s173
          %176 = dma.hbm_to_vmem [thread:$0]  %s1, 128, %s174, [#allocation3]
        $region16: #{tpu_custom_call.1} parent=11 // pred_fallthru
          _
        // Predicated region
        $region17: #{tpu_custom_call.1} parent=11 // pred_check
          %p177 = pneg %p83
        $region18: #{tpu_custom_call.1} parent=11 // pred_check_branch
          %179 = sbr.rel (%p177) target = $region20
        $region19: #{tpu_custom_call.1} parent=11 // pred_region
          _
        $region20: #{tpu_custom_call.1} parent=11 // pred_fallthru
          _
        // Predicated region
        $region21: #{tpu_custom_call.1} parent=11 // pred_check
          %p180 = pneg %p104
        $region22: #{tpu_custom_call.1} parent=11 // pred_check_branch
          %182 = sbr.rel (%p180) target = $region24
        $region23: #{tpu_custom_call.1} parent=11 // pred_region
          _
        $region24: #{tpu_custom_call.1} parent=11 // pred_fallthru
          _
        // Predicated region
        $region25: #{tpu_custom_call.1} parent=11 // pred_check
          %p183 = pneg %p125
        $region26: #{tpu_custom_call.1} parent=11 // pred_check_branch
          %185 = sbr.rel (%p183) target = $region28
        $region27: #{tpu_custom_call.1} parent=11 // pred_region
          _
        $region28: #{tpu_custom_call.1} parent=11 // pred_fallthru
          _
      $region12: #{tpu_custom_call.1} parent=5 // pred_fallthru
        _
      %p186 = scmp.lt.s32.totalorder %s15, 2
      // Predicated region
      $region29: #{tpu_custom_call.1} parent=5 // pred_check
        %p187 = pneg %p186
      $region30: #{tpu_custom_call.1} parent=5 // pred_check_branch
        %189 = sbr.rel (%p187) target = $region32
      $region31: #{tpu_custom_call.1} parent=5 // pred_region
        // Predicated region
        $region33: #{tpu_custom_call.1} parent=31 // pred_check
          %p190 = pneg %p35
        $region34: #{tpu_custom_call.1} parent=31 // pred_check_branch
          %192 = sbr.rel (%p190) target = $region36
        $region35: #{tpu_custom_call.1} parent=31 // pred_region
          %p193 = scmp.lt.s32.totalorder %s15, 1
          %s194 = scalar_select %p193, %s15, 1
          %s195 = smul.addr %s194, 2
          %s196 = smul.addr %s195, 4
          %s197 = scalar_lea.vmem %s0, %s196
        $region36: #{tpu_custom_call.1} parent=31 // pred_fallthru
          _
      $region32: #{tpu_custom_call.1} parent=5 // pred_fallthru
        _
      %p198 = scmp.le.s32.totalorder 1, %s15
      %p199 = scmp.lt.s32.totalorder %s15, 3
      %p200 = pnand %p198, %p199
      %p201 = pneg %p200
      // Predicated region
      $region37: #{tpu_custom_call.1} parent=5 // pred_check
        _
      $region38: #{tpu_custom_call.1} parent=5 // pred_check_branch
        %203 = sbr.rel (%p200) target = $region40
      $region39: #{tpu_custom_call.1} parent=5 // pred_region
        %s204 = ssub.s32 %s15, 1
        // Predicated region
        $region41: #{tpu_custom_call.1} parent=39 // pred_check
          %p205 = pneg %p62
        $region42: #{tpu_custom_call.1} parent=39 // pred_check_branch
          %207 = sbr.rel (%p205) target = $region44
        $region43: #{tpu_custom_call.1} parent=39 // pred_region
          %208 = dma.done [#allocation3], 128
        $region44: #{tpu_custom_call.1} parent=39 // pred_fallthru
          _
        %p209 = scmp.lt.s32.totalorder %s20, 1
        %s210 = scalar_select %p209, %s20, 1
        %s211 = smul.addr %s210, 2
        %s212 = smul.addr %s211, 4
        %s213 = scalar_lea.vmem %s0, %s212
        %p214 = pneg %p41
        %p215 = pneg %p38
        %p216 = pneg %p62
        %p217 = pneg %p59
        %p218 = pneg %p83
        %p219 = pneg %p80
        %p220 = pneg %p104
        %p221 = pneg %p101
        %p222 = pneg %p125
        %p223 = pneg %p122
        %p224 = pneg %p151
        %p225 = pneg %p148
        %s226 = sand.u32 %s138, 1
        %s227 = scalar_lea.sflag [#allocation4], %s226
        %s228 = sand.u32 %s138, 1
        %s229 = smul.addr %s228, 16
        %s230 = scalar_lea.vmem [#allocation5], %s229
        %p231 = scmp.lt.s32.totalorder %s20, 1
        %s232 = scalar_select %p231, %s20, 1
        %s233 = smul.addr %s232, 2
        %s234 = smul.addr %s233, 4
        %s235 = scalar_lea.vmem %s0, %s234
        %v239 = vlaneseq
        %v240 = vand.u32 %v239, 127
        %v241 = vadd.s32 %v240, 128
        %vm242 = vcmp.lt.s32.totalorder %v240, 0
        %v243 = vsub.s32 0, %v240
        %v244 = vsel %vm242, %v243, %v240
        %v245 = vshrl.u32 %v244, 4
        %v246 = vand.u32 %v244, 15
        %v247 = vsub.s32 0, %v246
        %v248 = vsel %vm242, %v247, %v246
        %vm249 = vcmp.lt.s32.totalorder %v241, 0
        %v250 = vsub.s32 0, %v241
        %v251 = vsel %vm249, %v250, %v241
        %v252 = vshrl.u32 %v251, 4
        %v253 = vand.u32 %v251, 15
        %v254 = vsub.s32 0, %v253
        %v255 = vsel %vm249, %v254, %v253
        %vm256 = vcmp.ne.s32.totalorder %v248, 0
        %vm257 = vcmp.ne.s32.totalorder %v255, 0
        %vm258 = vcmp.lt.s32.totalorder %v248, 0
        %vm259 = vcmp.lt.s32.totalorder %v255, 0
        %vm260 = vmand %vm258, %vm256
        %vm261 = vmand %vm259, %vm257
        %v262 = vadd.s32 %v248, 16
        %v263 = vadd.s32 %v255, 16
        %v264 = vsel %vm260, %v262, %v248
        %v265 = vsel %vm261, %v263, %v255
        %v266 = vld [vmem:[%s235] sm:$0xff]
        %v268 = vcombine.high %v266, %v266
        %269 = vrot.lane.b32.xlu0 %v266, 17
        %v270 = vpop.permute.xlu0 %269
        %271 = vrot.lane.b32.xlu0 %v268, 17
        %v272 = vpop.permute.xlu0 %271
        %vm273 = vcmask 138240
        %v274 = vsel %vm273, %v270, %v272
        %v278 = vsel %vm273, 0.0, %v270
        %v279 = vsel %vm273, %v272, 0.0
        %v280 = vpack.c.bf16 %v278, %v278
        %v281 = vpack.c.bf16 %v274, %v274
        %v282 = vpack.c.bf16 %v279, %v279
        %v283 = vld [vmem:[#allocation2] sm:$0xff]
        %v284 = vpack.c.bf16 %v283, %v283
        %vm285 = vcmp.ge.s32.totalorder %v264, 1
        %vm286 = vcmp.ge.s32.totalorder %v265, 1
        %v287 = vsel %vm285, 1, 0
        %v288 = vsel %vm286, 1, 0
        %vm289 = vcmp.eq.s32.totalorder %v287, 1
        %vm290 = vcmp.eq.s32.totalorder %v288, 1
        %vm291 = vmpackc.low %vm290, %vm289
        %v292 = vsel %vm291, 65537, 0
        %v293 = vlaneseq
        %v294 = vshrl.u32 %v293, 7
        %v295 = vsub.s32 0, %v294
        %v296 = vrot.slane %v292, %v295
        %v297 = vlaneseq
        %v298 = vshrl.u32 %v297, 7
        %v299 = vsub.s32 4, %v298
        %v300 = vrot.slane %v292, %v299
        %vm301 = vcmp.ne.s16.totalorder %v296, 0
        %vm302 = vcmp.ne.s16.totalorder %v300, 0
        %v303 = vsel %vm301, %v280, 0
        %v304 = vsel %vm302, %v281, 0
        %306 = vrot.lane.b32.xlu0 %v284, 124
        %v307 = vpop.permute.xlu0 %306
        %311 = vrot.lane.b32.xlu0 %v280, 127
        %v312 = vpop.permute.xlu0 %311
        %313 = vrot.lane.b32.xlu0 %v281, 127
        %v314 = vpop.permute.xlu0 %313
        %315 = vrot.lane.b32.xlu0 %v282, 127
        %v316 = vpop.permute.xlu0 %315
        %vm317 = vcmask 1039360
        %v318 = vsel %vm317, %v312, %v314
        %v319 = vsel %vm317, %v314, %v316
        %vm320 = vcmask 31744
        %v322 = vsel %vm320, %v307, 0
        %vm324 = vcmask 1041408
        %v326 = vsel %vm324, %v318, 0
        %v329 = vsel %vm324, %v319, 0
        %331 = vmatprep.subr.bf16.mxu0 %v329
        %332 = vmatpush1.bf16.msra.mxu0 %v326
        %333 = vmatprep.subr.bf16.mxu0 0
        %334 = vmatpush1.bf16.msra.mxu0 0
        %335 = vmatprep.subr.bf16.mxu0 0
        %336 = vmatpush1.bf16.msra.mxu0 0
        %337 = vmatprep.subr.bf16.mxu0 0
        %338 = vmatpush1.bf16.msra.mxu0 0
        %339 = vmatprep.subr.bf16.mxu0 0
        %340 = vmatpush1.bf16.msra.mxu0 0
        %341 = vmatprep.subr.bf16.mxu0 0
        %342 = vmatpush1.bf16.msra.mxu0 0
        %343 = vmatprep.subr.bf16.mxu0 0
        %344 = vmatpush1.bf16.msra.mxu0 0
        %345 = vmatprep.subr.bf16.mxu0 0
        %346 = vmatpush1.bf16.msra.mxu0 0
        %347 = vmatprep.subr.bf16.mxu0 0
        %348 = vmatpush1.bf16.msra.mxu0 0
        %349 = vmatprep.subr.bf16.mxu0 0
        %350 = vmatpush1.bf16.msra.mxu0 0
        %351 = vmatprep.subr.bf16.mxu0 0
        %352 = vmatpush1.bf16.msra.mxu0 0
        %353 = vmatprep.subr.bf16.mxu0 0
        %354 = vmatpush1.bf16.msra.mxu0 0
        %355 = vmatprep.subr.bf16.mxu0 0
        %356 = vmatpush1.bf16.msra.mxu0 0
        %357 = vmatprep.subr.bf16.mxu0 0
        %358 = vmatpush1.bf16.msra.mxu0 0
        %359 = vmatprep.subr.bf16.mxu0 0
        %360 = vmatpush1.bf16.msra.mxu0 0
        %361 = vmatprep.subr.bf16.mxu0 0
        %362 = vmatpush1.bf16.msra.mxu0 0
        %363 = vmatprep.mubr.bf16.mxu0 0
        %364 = vmatmul.mubr.bf16.gmra.mrb[0].mxu0 %v322
        %v365 = vpop.f32.mrb[0].mxu0
        %v366 = vadd.f32 0.0, %v365
        %v367 = vpop.f32.mrb[0].mxu0
        %v368 = vadd.f32 0.0, %v367
        %v369 = vpop.f32.mrb[0].mxu0
        %v370 = vpop.f32.mrb[0].mxu0
        %371 = vdwg.mxu0
        %v373 = vsel %vm320, %v284, 0
        %v376 = vsel %vm324, %v303, 0
        %v379 = vsel %vm324, %v304, 0
        %381 = vmatprep.subr.bf16.mxu0 %v379
        %382 = vmatpush1.bf16.msra.mxu0 %v376
        %383 = vmatprep.subr.bf16.mxu0 0
        %384 = vmatpush1.bf16.msra.mxu0 0
        %385 = vmatprep.subr.bf16.mxu0 0
        %386 = vmatpush1.bf16.msra.mxu0 0
        %387 = vmatprep.subr.bf16.mxu0 0
        %388 = vmatpush1.bf16.msra.mxu0 0
        %389 = vmatprep.subr.bf16.mxu0 0
        %390 = vmatpush1.bf16.msra.mxu0 0
        %391 = vmatprep.subr.bf16.mxu0 0
        %392 = vmatpush1.bf16.msra.mxu0 0
        %393 = vmatprep.subr.bf16.mxu0 0
        %394 = vmatpush1.bf16.msra.mxu0 0
        %395 = vmatprep.subr.bf16.mxu0 0
        %396 = vmatpush1.bf16.msra.mxu0 0
        %397 = vmatprep.subr.bf16.mxu0 0
        %398 = vmatpush1.bf16.msra.mxu0 0
        %399 = vmatprep.subr.bf16.mxu0 0
        %400 = vmatpush1.bf16.msra.mxu0 0
        %401 = vmatprep.subr.bf16.mxu0 0
        %402 = vmatpush1.bf16.msra.mxu0 0
        %403 = vmatprep.subr.bf16.mxu0 0
        %404 = vmatpush1.bf16.msra.mxu0 0
        %405 = vmatprep.subr.bf16.mxu0 0
        %406 = vmatpush1.bf16.msra.mxu0 0
        %407 = vmatprep.subr.bf16.mxu0 0
        %408 = vmatpush1.bf16.msra.mxu0 0
        %409 = vmatprep.subr.bf16.mxu0 0
        %410 = vmatpush1.bf16.msra.mxu0 0
        %411 = vmatprep.subr.bf16.mxu0 0
        %412 = vmatpush1.bf16.msra.mxu0 0
        %413 = vmatprep.mubr.bf16.mxu0 0
        %414 = vmatmul.mubr.bf16.gmra.mrb[0].mxu0 %v373
        %v415 = vpop.f32.mrb[0].mxu0
        %v416 = vadd.f32 %v366, %v415
        %v417 = vpop.f32.mrb[0].mxu0
        %v418 = vadd.f32 %v368, %v417
        %v419 = vpop.f32.mrb[0].mxu0
        %v420 = vpop.f32.mrb[0].mxu0
        %421 = vdwg.mxu0
        %vm422 = vcmp.lt.s32.totalorder %v264, 15
        %vm423 = vcmp.lt.s32.totalorder %v265, 15
        %v424 = vsel %vm422, 1, 0
        %v425 = vsel %vm423, 1, 0
        %vm426 = vcmp.eq.s32.totalorder %v424, 1
        %vm427 = vcmp.eq.s32.totalorder %v425, 1
        %vm428 = vmpackc.low %vm427, %vm426
        %v429 = vsel %vm428, 65537, 0
        %v430 = vlaneseq
        %v431 = vshrl.u32 %v430, 7
        %v432 = vsub.s32 0, %v431
        %v433 = vrot.slane %v429, %v432
        %v434 = vlaneseq
        %v435 = vshrl.u32 %v434, 7
        %v436 = vsub.s32 4, %v435
        %v437 = vrot.slane %v429, %v436
        %438 = vrot.lane.b32.xlu0 %v433, 2
        %v439 = vpop.permute.xlu0 %438
        %440 = vrot.lane.b32.xlu0 %v437, 2
        %v441 = vpop.permute.xlu0 %440
        %vm442 = vcmask 15360
        %v443 = vsel %vm442, %v439, %v441
        %vm444 = vcmp.ne.s16.totalorder %v439, 0
        %vm445 = vcmp.ne.s16.totalorder %v443, 0
        %vm446 = vcmp.ne.s16.totalorder %v441, 0
        %v447 = vsel %vm444, %v280, 0
        %v448 = vsel %vm445, %v281, 0
        %v449 = vsel %vm446, %v282, 0
        %450 = vrot.lane.b32.xlu0 %v284, 120
        %v451 = vpop.permute.xlu0 %450
        %455 = vrot.lane.b32.xlu0 %v447, 126
        %v456 = vpop.permute.xlu0 %455
        %457 = vrot.lane.b32.xlu0 %v448, 126
        %v458 = vpop.permute.xlu0 %457
        %459 = vrot.lane.b32.xlu0 %v449, 126
        %v460 = vpop.permute.xlu0 %459
        %vm461 = vcmask 1031168
        %v462 = vsel %vm461, %v456, %v458
        %v463 = vsel %vm461, %v458, %v460
        %v465 = vsel %vm320, %v451, 0
        %v468 = vsel %vm324, %v462, 0
        %v471 = vsel %vm324, %v463, 0
        %473 = vmatprep.subr.bf16.mxu0 %v471
        %474 = vmatpush1.bf16.msra.mxu0 %v468
        %475 = vmatprep.subr.bf16.mxu0 0
        %476 = vmatpush1.bf16.msra.mxu0 0
        %477 = vmatprep.subr.bf16.mxu0 0
        %478 = vmatpush1.bf16.msra.mxu0 0
        %479 = vmatprep.subr.bf16.mxu0 0
        %480 = vmatpush1.bf16.msra.mxu0 0
        %481 = vmatprep.subr.bf16.mxu0 0
        %482 = vmatpush1.bf16.msra.mxu0 0
        %483 = vmatprep.subr.bf16.mxu0 0
        %484 = vmatpush1.bf16.msra.mxu0 0
        %485 = vmatprep.subr.bf16.mxu0 0
        %486 = vmatpush1.bf16.msra.mxu0 0
        %487 = vmatprep.subr.bf16.mxu0 0
        %488 = vmatpush1.bf16.msra.mxu0 0
        %489 = vmatprep.subr.bf16.mxu0 0
        %490 = vmatpush1.bf16.msra.mxu0 0
        %491 = vmatprep.subr.bf16.mxu0 0
        %492 = vmatpush1.bf16.msra.mxu0 0
        %493 = vmatprep.subr.bf16.mxu0 0
        %494 = vmatpush1.bf16.msra.mxu0 0
        %495 = vmatprep.subr.bf16.mxu0 0
        %496 = vmatpush1.bf16.msra.mxu0 0
        %497 = vmatprep.subr.bf16.mxu0 0
        %498 = vmatpush1.bf16.msra.mxu0 0
        %499 = vmatprep.subr.bf16.mxu0 0
        %500 = vmatpush1.bf16.msra.mxu0 0
        %501 = vmatprep.subr.bf16.mxu0 0
        %502 = vmatpush1.bf16.msra.mxu0 0
        %503 = vmatprep.subr.bf16.mxu0 0
        %504 = vmatpush1.bf16.msra.mxu0 0
        %505 = vmatprep.mubr.bf16.mxu0 0
        %506 = vmatmul.mubr.bf16.gmra.mrb[0].mxu0 %v465
        %v507 = vpop.f32.mrb[0].mxu0
        %v508 = vadd.f32 0.0, %v507
        %v509 = vpop.f32.mrb[0].mxu0
        %v510 = vadd.f32 0.0, %v509
        %v511 = vpop.f32.mrb[0].mxu0
        %v512 = vpop.f32.mrb[0].mxu0
        %513 = vdwg.mxu0
        %v514 = vadd.f32 %v416, %v508
        %v515 = vadd.f32 %v418, %v510
        %516 = vrot.lane.b32.xlu0 %v296, 16
        %v517 = vpop.permute.xlu0 %516
        %518 = vrot.lane.b32.xlu0 %v300, 16
        %v519 = vpop.permute.xlu0 %518
        %vm520 = vcmask 130048
        %v521 = vsel %vm520, %v517, %v519
        %vm522 = vcmp.ne.s16.totalorder %v517, 0
        %vm523 = vcmp.ne.s16.totalorder %v521, 0
        %vm524 = vcmp.ne.s16.totalorder %v519, 0
        %v525 = vsel %vm522, %v280, 0
        %v526 = vsel %vm523, %v281, 0
        %v527 = vsel %vm524, %v282, 0
        %528 = vrot.lane.b32.xlu0 %v284, 116
        %v529 = vpop.permute.xlu0 %528
        %533 = vrot.lane.b32.xlu0 %v525, 112
        %v534 = vpop.permute.xlu0 %533
        %535 = vrot.lane.b32.xlu0 %v526, 112
        %v536 = vpop.permute.xlu0 %535
        %537 = vrot.lane.b32.xlu0 %v527, 112
        %v538 = vpop.permute.xlu0 %537
        %vm539 = vcmask 916480
        %v540 = vsel %vm539, %v534, %v536
        %v541 = vsel %vm539, %v536, %v538
        %v543 = vsel %vm320, %v529, 0
        %v546 = vsel %vm324, %v540, 0
        %v549 = vsel %vm324, %v541, 0
        %551 = vmatprep.subr.bf16.mxu0 %v549
        %552 = vmatpush1.bf16.msra.mxu0 %v546
        %553 = vmatprep.subr.bf16.mxu0 0
        %554 = vmatpush1.bf16.msra.mxu0 0
        %555 = vmatprep.subr.bf16.mxu0 0
        %556 = vmatpush1.bf16.msra.mxu0 0
        %557 = vmatprep.subr.bf16.mxu0 0
        %558 = vmatpush1.bf16.msra.mxu0 0
        %559 = vmatprep.subr.bf16.mxu0 0
        %560 = vmatpush1.bf16.msra.mxu0 0
        %561 = vmatprep.subr.bf16.mxu0 0
        %562 = vmatpush1.bf16.msra.mxu0 0
        %563 = vmatprep.subr.bf16.mxu0 0
        %564 = vmatpush1.bf16.msra.mxu0 0
        %565 = vmatprep.subr.bf16.mxu0 0
        %566 = vmatpush1.bf16.msra.mxu0 0
        %567 = vmatprep.subr.bf16.mxu0 0
        %568 = vmatpush1.bf16.msra.mxu0 0
        %569 = vmatprep.subr.bf16.mxu0 0
        %570 = vmatpush1.bf16.msra.mxu0 0
        %571 = vmatprep.subr.bf16.mxu0 0
        %572 = vmatpush1.bf16.msra.mxu0 0
        %573 = vmatprep.subr.bf16.mxu0 0
        %574 = vmatpush1.bf16.msra.mxu0 0
        %575 = vmatprep.subr.bf16.mxu0 0
        %576 = vmatpush1.bf16.msra.mxu0 0
        %577 = vmatprep.subr.bf16.mxu0 0
        %578 = vmatpush1.bf16.msra.mxu0 0
        %579 = vmatprep.subr.bf16.mxu0 0
        %580 = vmatpush1.bf16.msra.mxu0 0
        %581 = vmatprep.subr.bf16.mxu0 0
        %582 = vmatpush1.bf16.msra.mxu0 0
        %583 = vmatprep.mubr.bf16.mxu0 0
        %584 = vmatmul.mubr.bf16.gmra.mrb[0].mxu0 %v543
        %v585 = vpop.f32.mrb[0].mxu0
        %v586 = vadd.f32 0.0, %v585
        %v587 = vpop.f32.mrb[0].mxu0
        %v588 = vadd.f32 0.0, %v587
        %v589 = vpop.f32.mrb[0].mxu0
        %v590 = vpop.f32.mrb[0].mxu0
        %591 = vdwg.mxu0
        %v592 = vadd.f32 %v514, %v586
        %v593 = vadd.f32 %v515, %v588
        %594 = vrot.lane.b32.xlu0 %v284, 112
        %v595 = vpop.permute.xlu0 %594
        %596 = vrot.lane.b32.xlu0 %v280, 111
        %v597 = vpop.permute.xlu0 %596
        %598 = vrot.lane.b32.xlu0 %v281, 111
        %v599 = vpop.permute.xlu0 %598
        %600 = vrot.lane.b32.xlu0 %v282, 111
        %v601 = vpop.permute.xlu0 %600
        %vm602 = vcmask 908288
        %v603 = vsel %vm602, %v597, %v599
        %v604 = vsel %vm602, %v599, %v601
        %v606 = vsel %vm320, %v595, 0
        %v609 = vsel %vm324, %v603, 0
        %v612 = vsel %vm324, %v604, 0
        %614 = vmatprep.subr.bf16.mxu0 %v612
        %615 = vmatpush1.bf16.msra.mxu0 %v609
        %616 = vmatprep.subr.bf16.mxu0 0
        %617 = vmatpush1.bf16.msra.mxu0 0
        %618 = vmatprep.subr.bf16.mxu0 0
        %619 = vmatpush1.bf16.msra.mxu0 0
        %620 = vmatprep.subr.bf16.mxu0 0
        %621 = vmatpush1.bf16.msra.mxu0 0
        %622 = vmatprep.subr.bf16.mxu0 0
        %623 = vmatpush1.bf16.msra.mxu0 0
        %624 = vmatprep.subr.bf16.mxu0 0
        %625 = vmatpush1.bf16.msra.mxu0 0
        %626 = vmatprep.subr.bf16.mxu0 0
        %627 = vmatpush1.bf16.msra.mxu0 0
        %628 = vmatprep.subr.bf16.mxu0 0
        %629 = vmatpush1.bf16.msra.mxu0 0
        %630 = vmatprep.subr.bf16.mxu0 0
        %631 = vmatpush1.bf16.msra.mxu0 0
        %632 = vmatprep.subr.bf16.mxu0 0
        %633 = vmatpush1.bf16.msra.mxu0 0
        %634 = vmatprep.subr.bf16.mxu0 0
        %635 = vmatpush1.bf16.msra.mxu0 0
        %636 = vmatprep.subr.bf16.mxu0 0
        %637 = vmatpush1.bf16.msra.mxu0 0
        %638 = vmatprep.subr.bf16.mxu0 0
        %639 = vmatpush1.bf16.msra.mxu0 0
        %640 = vmatprep.subr.bf16.mxu0 0
        %641 = vmatpush1.bf16.msra.mxu0 0
        %642 = vmatprep.subr.bf16.mxu0 0
        %643 = vmatpush1.bf16.msra.mxu0 0
        %644 = vmatprep.subr.bf16.mxu0 0
        %645 = vmatpush1.bf16.msra.mxu0 0
        %646 = vmatprep.mubr.bf16.mxu0 0
        %647 = vmatmul.mubr.bf16.gmra.mrb[0].mxu0 %v606
        %v648 = vpop.f32.mrb[0].mxu0
        %v649 = vadd.f32 0.0, %v648
        %v650 = vpop.f32.mrb[0].mxu0
        %v651 = vadd.f32 0.0, %v650
        %v652 = vpop.f32.mrb[0].mxu0
        %v653 = vpop.f32.mrb[0].mxu0
        %654 = vdwg.mxu0
        %v655 = vadd.f32 %v592, %v649
        %v656 = vadd.f32 %v593, %v651
        %657 = vrot.lane.b32.xlu0 %v433, 18
        %v658 = vpop.permute.xlu0 %657
        %659 = vrot.lane.b32.xlu0 %v437, 18
        %v660 = vpop.permute.xlu0 %659
        %vm661 = vcmask 146432
        %v662 = vsel %vm661, %v658, %v660
        %vm663 = vcmp.ne.s16.totalorder %v658, 0
        %vm664 = vcmp.ne.s16.totalorder %v662, 0
        %vm665 = vcmp.ne.s16.totalorder %v660, 0
        %v666 = vsel %vm663, %v280, 0
        %v667 = vsel %vm664, %v281, 0
        %v668 = vsel %vm665, %v282, 0
        %669 = vrot.lane.b32.xlu0 %v284, 108
        %v670 = vpop.permute.xlu0 %669
        %674 = vrot.lane.b32.xlu0 %v666, 110
        %v675 = vpop.permute.xlu0 %674
        %676 = vrot.lane.b32.xlu0 %v667, 110
        %v677 = vpop.permute.xlu0 %676
        %678 = vrot.lane.b32.xlu0 %v668, 110
        %v679 = vpop.permute.xlu0 %678
        %vm680 = vcmask 900096
        %v681 = vsel %vm680, %v675, %v677
        %v682 = vsel %vm680, %v677, %v679
        %v684 = vsel %vm320, %v670, 0
        %v687 = vsel %vm324, %v681, 0
        %v690 = vsel %vm324, %v682, 0
        %692 = vmatprep.subr.bf16.mxu0 %v690
        %693 = vmatpush1.bf16.msra.mxu0 %v687
        %694 = vmatprep.subr.bf16.mxu0 0
        %695 = vmatpush1.bf16.msra.mxu0 0
        %696 = vmatprep.subr.bf16.mxu0 0
        %697 = vmatpush1.bf16.msra.mxu0 0
        %698 = vmatprep.subr.bf16.mxu0 0
        %699 = vmatpush1.bf16.msra.mxu0 0
        %700 = vmatprep.subr.bf16.mxu0 0
        %701 = vmatpush1.bf16.msra.mxu0 0
        %702 = vmatprep.subr.bf16.mxu0 0
        %703 = vmatpush1.bf16.msra.mxu0 0
        %704 = vmatprep.subr.bf16.mxu0 0
        %705 = vmatpush1.bf16.msra.mxu0 0
        %706 = vmatprep.subr.bf16.mxu0 0
        %707 = vmatpush1.bf16.msra.mxu0 0
        %708 = vmatprep.subr.bf16.mxu0 0
        %709 = vmatpush1.bf16.msra.mxu0 0
        %710 = vmatprep.subr.bf16.mxu0 0
        %711 = vmatpush1.bf16.msra.mxu0 0
        %712 = vmatprep.subr.bf16.mxu0 0
        %713 = vmatpush1.bf16.msra.mxu0 0
        %714 = vmatprep.subr.bf16.mxu0 0
        %715 = vmatpush1.bf16.msra.mxu0 0
        %716 = vmatprep.subr.bf16.mxu0 0
        %717 = vmatpush1.bf16.msra.mxu0 0
        %718 = vmatprep.subr.bf16.mxu0 0
        %719 = vmatpush1.bf16.msra.mxu0 0
        %720 = vmatprep.subr.bf16.mxu0 0
        %721 = vmatpush1.bf16.msra.mxu0 0
        %722 = vmatprep.subr.bf16.mxu0 0
        %723 = vmatpush1.bf16.msra.mxu0 0
        %724 = vmatprep.mubr.bf16.mxu0 0
        %725 = vmatmul.mubr.bf16.gmra.mrb[0].mxu0 %v684
        %v726 = vpop.f32.mrb[0].mxu0
        %v727 = vadd.f32 0.0, %v726
        %v728 = vpop.f32.mrb[0].mxu0
        %v729 = vadd.f32 0.0, %v728
        %v730 = vpop.f32.mrb[0].mxu0
        %v731 = vpop.f32.mrb[0].mxu0
        %732 = vdwg.mxu0
        %v733 = vadd.f32 %v655, %v727
        %v734 = vadd.f32 %v656, %v729
        %735 = vrot.lane.b32.xlu0 %v296, 32
        %v736 = vpop.permute.xlu0 %735
        %737 = vrot.lane.b32.xlu0 %v300, 32
        %v738 = vpop.permute.xlu0 %737
        %vm739 = vcmask 261120
        %v740 = vsel %vm739, %v736, %v738
        %vm741 = vcmp.ne.s16.totalorder %v736, 0
        %vm742 = vcmp.ne.s16.totalorder %v740, 0
        %vm743 = vcmp.ne.s16.totalorder %v738, 0
        %v744 = vsel %vm741, %v280, 0
        %v745 = vsel %vm742, %v281, 0
        %v746 = vsel %vm743, %v282, 0
        %747 = vrot.lane.b32.xlu0 %v284, 104
        %v748 = vpop.permute.xlu0 %747
        %752 = vrot.lane.b32.xlu0 %v744, 96
        %v753 = vpop.permute.xlu0 %752
        %754 = vrot.lane.b32.xlu0 %v745, 96
        %v755 = vpop.permute.xlu0 %754
        %756 = vrot.lane.b32.xlu0 %v746, 96
        %v757 = vpop.permute.xlu0 %756
        %vm758 = vcmask 785408
        %v759 = vsel %vm758, %v753, %v755
        %v760 = vsel %vm758, %v755, %v757
        %v762 = vsel %vm320, %v748, 0
        %v765 = vsel %vm324, %v759, 0
        %v768 = vsel %vm324, %v760, 0
        %770 = vmatprep.subr.bf16.mxu0 %v768
        %771 = vmatpush1.bf16.msra.mxu0 %v765
        %772 = vmatprep.subr.bf16.mxu0 0
        %773 = vmatpush1.bf16.msra.mxu0 0
        %774 = vmatprep.subr.bf16.mxu0 0
        %775 = vmatpush1.bf16.msra.mxu0 0
        %776 = vmatprep.subr.bf16.mxu0 0
        %777 = vmatpush1.bf16.msra.mxu0 0
        %778 = vmatprep.subr.bf16.mxu0 0
        %779 = vmatpush1.bf16.msra.mxu0 0
        %780 = vmatprep.subr.bf16.mxu0 0
        %781 = vmatpush1.bf16.msra.mxu0 0
        %782 = vmatprep.subr.bf16.mxu0 0
        %783 = vmatpush1.bf16.msra.mxu0 0
        %784 = vmatprep.subr.bf16.mxu0 0
        %785 = vmatpush1.bf16.msra.mxu0 0
        %786 = vmatprep.subr.bf16.mxu0 0
        %787 = vmatpush1.bf16.msra.mxu0 0
        %788 = vmatprep.subr.bf16.mxu0 0
        %789 = vmatpush1.bf16.msra.mxu0 0
        %790 = vmatprep.subr.bf16.mxu0 0
        %791 = vmatpush1.bf16.msra.mxu0 0
        %792 = vmatprep.subr.bf16.mxu0 0
        %793 = vmatpush1.bf16.msra.mxu0 0
        %794 = vmatprep.subr.bf16.mxu0 0
        %795 = vmatpush1.bf16.msra.mxu0 0
        %796 = vmatprep.subr.bf16.mxu0 0
        %797 = vmatpush1.bf16.msra.mxu0 0
        %798 = vmatprep.subr.bf16.mxu0 0
        %799 = vmatpush1.bf16.msra.mxu0 0
        %800 = vmatprep.subr.bf16.mxu0 0
        %801 = vmatpush1.bf16.msra.mxu0 0
        %802 = vmatprep.mubr.bf16.mxu0 0
        %803 = vmatmul.mubr.bf16.gmra.mrb[0].mxu0 %v762
        %v804 = vpop.f32.mrb[0].mxu0
        %v805 = vadd.f32 0.0, %v804
        %v806 = vpop.f32.mrb[0].mxu0
        %v807 = vadd.f32 0.0, %v806
        %v808 = vpop.f32.mrb[0].mxu0
        %v809 = vpop.f32.mrb[0].mxu0
        %810 = vdwg.mxu0
        %v811 = vadd.f32 %v733, %v805
        %v812 = vadd.f32 %v734, %v807
        %813 = vrot.lane.b32.xlu0 %v284, 100
        %v814 = vpop.permute.xlu0 %813
        %815 = vrot.lane.b32.xlu0 %v280, 95
        %v816 = vpop.permute.xlu0 %815
        %817 = vrot.lane.b32.xlu0 %v281, 95
        %v818 = vpop.permute.xlu0 %817
        %819 = vrot.lane.b32.xlu0 %v282, 95
        %v820 = vpop.permute.xlu0 %819
        %vm821 = vcmask 777216
        %v822 = vsel %vm821, %v816, %v818
        %v823 = vsel %vm821, %v818, %v820
        %v825 = vsel %vm320, %v814, 0
        %v828 = vsel %vm324, %v822, 0
        %v831 = vsel %vm324, %v823, 0
        %833 = vmatprep.subr.bf16.mxu0 %v831
        %834 = vmatpush1.bf16.msra.mxu0 %v828
        %835 = vmatprep.subr.bf16.mxu0 0
        %836 = vmatpush1.bf16.msra.mxu0 0
        %837 = vmatprep.subr.bf16.mxu0 0
        %838 = vmatpush1.bf16.msra.mxu0 0
        %839 = vmatprep.subr.bf16.mxu0 0
        %840 = vmatpush1.bf16.msra.mxu0 0
        %841 = vmatprep.subr.bf16.mxu0 0
        %842 = vmatpush1.bf16.msra.mxu0 0
        %843 = vmatprep.subr.bf16.mxu0 0
        %844 = vmatpush1.bf16.msra.mxu0 0
        %845 = vmatprep.subr.bf16.mxu0 0
        %846 = vmatpush1.bf16.msra.mxu0 0
        %847 = vmatprep.subr.bf16.mxu0 0
        %848 = vmatpush1.bf16.msra.mxu0 0
        %849 = vmatprep.subr.bf16.mxu0 0
        %850 = vmatpush1.bf16.msra.mxu0 0
        %851 = vmatprep.subr.bf16.mxu0 0
        %852 = vmatpush1.bf16.msra.mxu0 0
        %853 = vmatprep.subr.bf16.mxu0 0
        %854 = vmatpush1.bf16.msra.mxu0 0
        %855 = vmatprep.subr.bf16.mxu0 0
        %856 = vmatpush1.bf16.msra.mxu0 0
        %857 = vmatprep.subr.bf16.mxu0 0
        %858 = vmatpush1.bf16.msra.mxu0 0
        %859 = vmatprep.subr.bf16.mxu0 0
        %860 = vmatpush1.bf16.msra.mxu0 0
        %861 = vmatprep.subr.bf16.mxu0 0
        %862 = vmatpush1.bf16.msra.mxu0 0
        %863 = vmatprep.subr.bf16.mxu0 0
        %864 = vmatpush1.bf16.msra.mxu0 0
        %865 = vmatprep.mubr.bf16.mxu0 0
        %866 = vmatmul.mubr.bf16.gmra.mrb[0].mxu0 %v825
        %v867 = vpop.f32.mrb[0].mxu0
        %v868 = vadd.f32 0.0, %v867
        %v869 = vpop.f32.mrb[0].mxu0
        %v870 = vadd.f32 0.0, %v869
        %v871 = vpop.f32.mrb[0].mxu0
        %v872 = vpop.f32.mrb[0].mxu0
        %873 = vdwg.mxu0
        %v874 = vadd.f32 %v811, %v868
        %v875 = vadd.f32 %v812, %v870
        %876 = vrot.lane.b32.xlu0 %v433, 34
        %v877 = vpop.permute.xlu0 %876
        %878 = vrot.lane.b32.xlu0 %v437, 34
        %v879 = vpop.permute.xlu0 %878
        %vm880 = vcmask 277504
        %v881 = vsel %vm880, %v877, %v879
        %vm882 = vcmp.ne.s16.totalorder %v877, 0
        %vm883 = vcmp.ne.s16.totalorder %v881, 0
        %vm884 = vcmp.ne.s16.totalorder %v879, 0
        %v885 = vsel %vm882, %v280, 0
        %v886 = vsel %vm883, %v281, 0
        %v887 = vsel %vm884, %v282, 0
        %888 = vrot.lane.b32.xlu0 %v284, 96
        %v889 = vpop.permute.xlu0 %888
        %893 = vrot.lane.b32.xlu0 %v885, 94
        %v894 = vpop.permute.xlu0 %893
        %895 = vrot.lane.b32.xlu0 %v886, 94
        %v896 = vpop.permute.xlu0 %895
        %897 = vrot.lane.b32.xlu0 %v887, 94
        %v898 = vpop.permute.xlu0 %897
        %vm899 = vcmask 769024
        %v900 = vsel %vm899, %v894, %v896
        %v901 = vsel %vm899, %v896, %v898
        %v903 = vsel %vm320, %v889, 0
        %v906 = vsel %vm324, %v900, 0
        %v909 = vsel %vm324, %v901, 0
        %911 = vmatprep.subr.bf16.mxu0 %v909
        %912 = vmatpush1.bf16.msra.mxu0 %v906
        %913 = vmatprep.subr.bf16.mxu0 0
        %914 = vmatpush1.bf16.msra.mxu0 0
        %915 = vmatprep.subr.bf16.mxu0 0
        %916 = vmatpush1.bf16.msra.mxu0 0
        %917 = vmatprep.subr.bf16.mxu0 0
        %918 = vmatpush1.bf16.msra.mxu0 0
        %919 = vmatprep.subr.bf16.mxu0 0
        %920 = vmatpush1.bf16.msra.mxu0 0
        %921 = vmatprep.subr.bf16.mxu0 0
        %922 = vmatpush1.bf16.msra.mxu0 0
        %923 = vmatprep.subr.bf16.mxu0 0
        %924 = vmatpush1.bf16.msra.mxu0 0
        %925 = vmatprep.subr.bf16.mxu0 0
        %926 = vmatpush1.bf16.msra.mxu0 0
        %927 = vmatprep.subr.bf16.mxu0 0
        %928 = vmatpush1.bf16.msra.mxu0 0
        %929 = vmatprep.subr.bf16.mxu0 0
        %930 = vmatpush1.bf16.msra.mxu0 0
        %931 = vmatprep.subr.bf16.mxu0 0
        %932 = vmatpush1.bf16.msra.mxu0 0
        %933 = vmatprep.subr.bf16.mxu0 0
        %934 = vmatpush1.bf16.msra.mxu0 0
        %935 = vmatprep.subr.bf16.mxu0 0
        %936 = vmatpush1.bf16.msra.mxu0 0
        %937 = vmatprep.subr.bf16.mxu0 0
        %938 = vmatpush1.bf16.msra.mxu0 0
        %939 = vmatprep.subr.bf16.mxu0 0
        %940 = vmatpush1.bf16.msra.mxu0 0
        %941 = vmatprep.subr.bf16.mxu0 0
        %942 = vmatpush1.bf16.msra.mxu0 0
        %943 = vmatprep.mubr.bf16.mxu0 0
        %944 = vmatmul.mubr.bf16.gmra.mrb[0].mxu0 %v903
        %v945 = vpop.f32.mrb[0].mxu0
        %v946 = vadd.f32 0.0, %v945
        %v947 = vpop.f32.mrb[0].mxu0
        %v948 = vadd.f32 0.0, %v947
        %v949 = vpop.f32.mrb[0].mxu0
        %v950 = vpop.f32.mrb[0].mxu0
        %951 = vdwg.mxu0
        %v952 = vadd.f32 %v874, %v946
        %v953 = vadd.f32 %v875, %v948
        %v954 = vld [vmem:[%s2] sm:$0xff]
        %956 = vset.pattern.permute.xlu0 0
        %957 = vperm.xlu0 %956, %v954
        %v958 = vpop.permute.xlu0 %957
        %v960 = vadd.f32 %v952, %v958
        %v961 = vadd.f32 %v953, %v958
        %vm962 = vcmp.ge.f32.partialorder %v960, 0.0
        %vm963 = vcmp.ge.f32.partialorder %v961, 0.0
        %v964 = vmul.f32 %v960, 0.1
        %v965 = vmul.f32 %v961, 0.1
        %v966 = vsel %vm962, %v960, %v964
        %v967 = vsel %vm963, %v961, %v965
        %970 = vrot.lane.b32.xlu0 %v966, 17
        %v971 = vpop.permute.xlu0 %970
        %972 = vrot.lane.b32.xlu0 %v967, 17
        %v973 = vpop.permute.xlu0 %972
        %v974 = vsel %vm273, %v971, %v973
        %v978 = vsel %vm273, 0.0, %v971
        %v979 = vsel %vm273, %v973, 0.0
        %v980 = vpack.c.bf16 %v978, %v978
        %v981 = vpack.c.bf16 %v974, %v974
        %v982 = vpack.c.bf16 %v979, %v979
        %v983 = vld [vmem:[%s3] sm:$0xff]
        %v984 = vpack.c.bf16 %v983, %v983
        %v985 = vsel %vm301, %v980, 0
        %v986 = vsel %vm302, %v981, 0
        %988 = vrot.lane.b32.xlu0 %v984, 120
        %v989 = vpop.permute.xlu0 %988
        %993 = vrot.lane.b32.xlu0 %v980, 127
        %v994 = vpop.permute.xlu0 %993
        %995 = vrot.lane.b32.xlu0 %v981, 127
        %v996 = vpop.permute.xlu0 %995
        %997 = vrot.lane.b32.xlu0 %v982, 127
        %v998 = vpop.permute.xlu0 %997
        %v999 = vsel %vm317, %v994, %v996
        %v1000 = vsel %vm317, %v996, %v998
        %vm1001 = vcmask 64512
        %v1003 = vsel %vm1001, %v989, 0
        %vm1005 = vcmask 1043456
        %v1007 = vsel %vm1005, %v999, 0
        %v1010 = vsel %vm1005, %v1000, 0
        %1012 = vmatprep.subr.bf16.mxu0 %v1010
        %1013 = vmatpush1.bf16.msra.mxu0 %v1007
        %1014 = vmatprep.subr.bf16.mxu0 0
        %1015 = vmatpush1.bf16.msra.mxu0 0
        %1016 = vmatprep.subr.bf16.mxu0 0
        %1017 = vmatpush1.bf16.msra.mxu0 0
        %1018 = vmatprep.subr.bf16.mxu0 0
        %1019 = vmatpush1.bf16.msra.mxu0 0
        %1020 = vmatprep.subr.bf16.mxu0 0
        %1021 = vmatpush1.bf16.msra.mxu0 0
        %1022 = vmatprep.subr.bf16.mxu0 0
        %1023 = vmatpush1.bf16.msra.mxu0 0
        %1024 = vmatprep.subr.bf16.mxu0 0
        %1025 = vmatpush1.bf16.msra.mxu0 0
        %1026 = vmatprep.subr.bf16.mxu0 0
        %1027 = vmatpush1.bf16.msra.mxu0 0
        %1028 = vmatprep.subr.bf16.mxu0 0
        %1029 = vmatpush1.bf16.msra.mxu0 0
        %1030 = vmatprep.subr.bf16.mxu0 0
        %1031 = vmatpush1.bf16.msra.mxu0 0
        %1032 = vmatprep.subr.bf16.mxu0 0
        %1033 = vmatpush1.bf16.msra.mxu0 0
        %1034 = vmatprep.subr.bf16.mxu0 0
        %1035 = vmatpush1.bf16.msra.mxu0 0
        %1036 = vmatprep.subr.bf16.mxu0 0
        %1037 = vmatpush1.bf16.msra.mxu0 0
        %1038 = vmatprep.subr.bf16.mxu0 0
        %1039 = vmatpush1.bf16.msra.mxu0 0
        %1040 = vmatprep.subr.bf16.mxu0 0
        %1041 = vmatpush1.bf16.msra.mxu0 0
        %1042 = vmatprep.subr.bf16.mxu0 0
        %1043 = vmatpush1.bf16.msra.mxu0 0
        %1044 = vmatprep.mubr.bf16.mxu0 0
        %1045 = vmatmul.mubr.bf16.gmra.mrb[0].mxu0 %v1003
        %v1046 = vpop.f32.mrb[0].mxu0
        %v1047 = vadd.f32 0.0, %v1046
        %v1048 = vpop.f32.mrb[0].mxu0
        %v1049 = vadd.f32 0.0, %v1048
        %v1050 = vpop.f32.mrb[0].mxu0
        %v1051 = vpop.f32.mrb[0].mxu0
        %1052 = vdwg.mxu0
        %v1054 = vsel %vm1001, %v984, 0
        %v1057 = vsel %vm1005, %v985, 0
        %v1060 = vsel %vm1005, %v986, 0
        %1062 = vmatprep.subr.bf16.mxu0 %v1060
        %1063 = vmatpush1.bf16.msra.mxu0 %v1057
        %1064 = vmatprep.subr.bf16.mxu0 0
        %1065 = vmatpush1.bf16.msra.mxu0 0
        %1066 = vmatprep.subr.bf16.mxu0 0
        %1067 = vmatpush1.bf16.msra.mxu0 0
        %1068 = vmatprep.subr.bf16.mxu0 0
        %1069 = vmatpush1.bf16.msra.mxu0 0
        %1070 = vmatprep.subr.bf16.mxu0 0
        %1071 = vmatpush1.bf16.msra.mxu0 0
        %1072 = vmatprep.subr.bf16.mxu0 0
        %1073 = vmatpush1.bf16.msra.mxu0 0
        %1074 = vmatprep.subr.bf16.mxu0 0
        %1075 = vmatpush1.bf16.msra.mxu0 0
        %1076 = vmatprep.subr.bf16.mxu0 0
        %1077 = vmatpush1.bf16.msra.mxu0 0
        %1078 = vmatprep.subr.bf16.mxu0 0
        %1079 = vmatpush1.bf16.msra.mxu0 0
        %1080 = vmatprep.subr.bf16.mxu0 0
        %1081 = vmatpush1.bf16.msra.mxu0 0
        %1082 = vmatprep.subr.bf16.mxu0 0
        %1083 = vmatpush1.bf16.msra.mxu0 0
        %1084 = vmatprep.subr.bf16.mxu0 0
        %1085 = vmatpush1.bf16.msra.mxu0 0
        %1086 = vmatprep.subr.bf16.mxu0 0
        %1087 = vmatpush1.bf16.msra.mxu0 0
        %1088 = vmatprep.subr.bf16.mxu0 0
        %1089 = vmatpush1.bf16.msra.mxu0 0
        %1090 = vmatprep.subr.bf16.mxu0 0
        %1091 = vmatpush1.bf16.msra.mxu0 0
        %1092 = vmatprep.subr.bf16.mxu0 0
        %1093 = vmatpush1.bf16.msra.mxu0 0
        %1094 = vmatprep.mubr.bf16.mxu0 0
        %1095 = vmatmul.mubr.bf16.gmra.mrb[0].mxu0 %v1054
        %v1096 = vpop.f32.mrb[0].mxu0
        %v1097 = vadd.f32 %v1047, %v1096
        %v1098 = vpop.f32.mrb[0].mxu0
        %v1099 = vadd.f32 %v1049, %v1098
        %v1100 = vpop.f32.mrb[0].mxu0
        %v1101 = vpop.f32.mrb[0].mxu0
        %1102 = vdwg.mxu0
        %v1103 = vsel %vm444, %v980, 0
        %v1104 = vsel %vm445, %v981, 0
        %v1105 = vsel %vm446, %v982, 0
        %1106 = vrot.lane.b32.xlu0 %v984, 112
        %v1107 = vpop.permute.xlu0 %1106
        %1111 = vrot.lane.b32.xlu0 %v1103, 126
        %v1112 = vpop.permute.xlu0 %1111
        %1113 = vrot.lane.b32.xlu0 %v1104, 126
        %v1114 = vpop.permute.xlu0 %1113
        %1115 = vrot.lane.b32.xlu0 %v1105, 126
        %v1116 = vpop.permute.xlu0 %1115
        %v1117 = vsel %vm461, %v1112, %v1114
        %v1118 = vsel %vm461, %v1114, %v1116
        %v1120 = vsel %vm1001, %v1107, 0
        %v1123 = vsel %vm1005, %v1117, 0
        %v1126 = vsel %vm1005, %v1118, 0
        %1128 = vmatprep.subr.bf16.mxu0 %v1126
        %1129 = vmatpush1.bf16.msra.mxu0 %v1123
        %1130 = vmatprep.subr.bf16.mxu0 0
        %1131 = vmatpush1.bf16.msra.mxu0 0
        %1132 = vmatprep.subr.bf16.mxu0 0
        %1133 = vmatpush1.bf16.msra.mxu0 0
        %1134 = vmatprep.subr.bf16.mxu0 0
        %1135 = vmatpush1.bf16.msra.mxu0 0
        %1136 = vmatprep.subr.bf16.mxu0 0
        %1137 = vmatpush1.bf16.msra.mxu0 0
        %1138 = vmatprep.subr.bf16.mxu0 0
        %1139 = vmatpush1.bf16.msra.mxu0 0
        %1140 = vmatprep.subr.bf16.mxu0 0
        %1141 = vmatpush1.bf16.msra.mxu0 0
        %1142 = vmatprep.subr.bf16.mxu0 0
        %1143 = vmatpush1.bf16.msra.mxu0 0
        %1144 = vmatprep.subr.bf16.mxu0 0
        %1145 = vmatpush1.bf16.msra.mxu0 0
        %1146 = vmatprep.subr.bf16.mxu0 0
        %1147 = vmatpush1.bf16.msra.mxu0 0
        %1148 = vmatprep.subr.bf16.mxu0 0
        %1149 = vmatpush1.bf16.msra.mxu0 0
        %1150 = vmatprep.subr.bf16.mxu0 0
        %1151 = vmatpush1.bf16.msra.mxu0 0
        %1152 = vmatprep.subr.bf16.mxu0 0
        %1153 = vmatpush1.bf16.msra.mxu0 0
        %1154 = vmatprep.subr.bf16.mxu0 0
        %1155 = vmatpush1.bf16.msra.mxu0 0
        %1156 = vmatprep.subr.bf16.mxu0 0
        %1157 = vmatpush1.bf16.msra.mxu0 0
        %1158 = vmatprep.subr.bf16.mxu0 0
        %1159 = vmatpush1.bf16.msra.mxu0 0
        %1160 = vmatprep.mubr.bf16.mxu0 0
        %1161 = vmatmul.mubr.bf16.gmra.mrb[0].mxu0 %v1120
        %v1162 = vpop.f32.mrb[0].mxu0
        %v1163 = vadd.f32 0.0, %v1162
        %v1164 = vpop.f32.mrb[0].mxu0
        %v1165 = vadd.f32 0.0, %v1164
        %v1166 = vpop.f32.mrb[0].mxu0
        %v1167 = vpop.f32.mrb[0].mxu0
        %1168 = vdwg.mxu0
        %v1169 = vadd.f32 %v1097, %v1163
        %v1170 = vadd.f32 %v1099, %v1165
        %v1171 = vsel %vm522, %v980, 0
        %v1172 = vsel %vm523, %v981, 0
        %v1173 = vsel %vm524, %v982, 0
        %1174 = vrot.lane.b32.xlu0 %v984, 104
        %v1175 = vpop.permute.xlu0 %1174
        %1179 = vrot.lane.b32.xlu0 %v1171, 112
        %v1180 = vpop.permute.xlu0 %1179
        %1181 = vrot.lane.b32.xlu0 %v1172, 112
        %v1182 = vpop.permute.xlu0 %1181
        %1183 = vrot.lane.b32.xlu0 %v1173, 112
        %v1184 = vpop.permute.xlu0 %1183
        %v1185 = vsel %vm539, %v1180, %v1182
        %v1186 = vsel %vm539, %v1182, %v1184
        %v1188 = vsel %vm1001, %v1175, 0
        %v1191 = vsel %vm1005, %v1185, 0
        %v1194 = vsel %vm1005, %v1186, 0
        %1196 = vmatprep.subr.bf16.mxu0 %v1194
        %1197 = vmatpush1.bf16.msra.mxu0 %v1191
        %1198 = vmatprep.subr.bf16.mxu0 0
        %1199 = vmatpush1.bf16.msra.mxu0 0
        %1200 = vmatprep.subr.bf16.mxu0 0
        %1201 = vmatpush1.bf16.msra.mxu0 0
        %1202 = vmatprep.subr.bf16.mxu0 0
        %1203 = vmatpush1.bf16.msra.mxu0 0
        %1204 = vmatprep.subr.bf16.mxu0 0
        %1205 = vmatpush1.bf16.msra.mxu0 0
        %1206 = vmatprep.subr.bf16.mxu0 0
        %1207 = vmatpush1.bf16.msra.mxu0 0
        %1208 = vmatprep.subr.bf16.mxu0 0
        %1209 = vmatpush1.bf16.msra.mxu0 0
        %1210 = vmatprep.subr.bf16.mxu0 0
        %1211 = vmatpush1.bf16.msra.mxu0 0
        %1212 = vmatprep.subr.bf16.mxu0 0
        %1213 = vmatpush1.bf16.msra.mxu0 0
        %1214 = vmatprep.subr.bf16.mxu0 0
        %1215 = vmatpush1.bf16.msra.mxu0 0
        %1216 = vmatprep.subr.bf16.mxu0 0
        %1217 = vmatpush1.bf16.msra.mxu0 0
        %1218 = vmatprep.subr.bf16.mxu0 0
        %1219 = vmatpush1.bf16.msra.mxu0 0
        %1220 = vmatprep.subr.bf16.mxu0 0
        %1221 = vmatpush1.bf16.msra.mxu0 0
        %1222 = vmatprep.subr.bf16.mxu0 0
        %1223 = vmatpush1.bf16.msra.mxu0 0
        %1224 = vmatprep.subr.bf16.mxu0 0
        %1225 = vmatpush1.bf16.msra.mxu0 0
        %1226 = vmatprep.subr.bf16.mxu0 0
        %1227 = vmatpush1.bf16.msra.mxu0 0
        %1228 = vmatprep.mubr.bf16.mxu0 0
        %1229 = vmatmul.mubr.bf16.gmra.mrb[0].mxu0 %v1188
        %v1230 = vpop.f32.mrb[0].mxu0
        %v1231 = vadd.f32 0.0, %v1230
        %v1232 = vpop.f32.mrb[0].mxu0
        %v1233 = vadd.f32 0.0, %v1232
        %v1234 = vpop.f32.mrb[0].mxu0
        %v1235 = vpop.f32.mrb[0].mxu0
        %1236 = vdwg.mxu0
        %v1237 = vadd.f32 %v1169, %v1231
        %v1238 = vadd.f32 %v1170, %v1233
        %1239 = vrot.lane.b32.xlu0 %v984, 96
        %v1240 = vpop.permute.xlu0 %1239
        %1241 = vrot.lane.b32.xlu0 %v980, 111
        %v1242 = vpop.permute.xlu0 %1241
        %1243 = vrot.lane.b32.xlu0 %v981, 111
        %v1244 = vpop.permute.xlu0 %1243
        %1245 = vrot.lane.b32.xlu0 %v982, 111
        %v1246 = vpop.permute.xlu0 %1245
        %v1247 = vsel %vm602, %v1242, %v1244
        %v1248 = vsel %vm602, %v1244, %v1246
        %v1250 = vsel %vm1001, %v1240, 0
        %v1253 = vsel %vm1005, %v1247, 0
        %v1256 = vsel %vm1005, %v1248, 0
        %1258 = vmatprep.subr.bf16.mxu0 %v1256
        %1259 = vmatpush1.bf16.msra.mxu0 %v1253
        %1260 = vmatprep.subr.bf16.mxu0 0
        %1261 = vmatpush1.bf16.msra.mxu0 0
        %1262 = vmatprep.subr.bf16.mxu0 0
        %1263 = vmatpush1.bf16.msra.mxu0 0
        %1264 = vmatprep.subr.bf16.mxu0 0
        %1265 = vmatpush1.bf16.msra.mxu0 0
        %1266 = vmatprep.subr.bf16.mxu0 0
        %1267 = vmatpush1.bf16.msra.mxu0 0
        %1268 = vmatprep.subr.bf16.mxu0 0
        %1269 = vmatpush1.bf16.msra.mxu0 0
        %1270 = vmatprep.subr.bf16.mxu0 0
        %1271 = vmatpush1.bf16.msra.mxu0 0
        %1272 = vmatprep.subr.bf16.mxu0 0
        %1273 = vmatpush1.bf16.msra.mxu0 0
        %1274 = vmatprep.subr.bf16.mxu0 0
        %1275 = vmatpush1.bf16.msra.mxu0 0
        %1276 = vmatprep.subr.bf16.mxu0 0
        %1277 = vmatpush1.bf16.msra.mxu0 0
        %1278 = vmatprep.subr.bf16.mxu0 0
        %1279 = vmatpush1.bf16.msra.mxu0 0
        %1280 = vmatprep.subr.bf16.mxu0 0
        %1281 = vmatpush1.bf16.msra.mxu0 0
        %1282 = vmatprep.subr.bf16.mxu0 0
        %1283 = vmatpush1.bf16.msra.mxu0 0
        %1284 = vmatprep.subr.bf16.mxu0 0
        %1285 = vmatpush1.bf16.msra.mxu0 0
        %1286 = vmatprep.subr.bf16.mxu0 0
        %1287 = vmatpush1.bf16.msra.mxu0 0
        %1288 = vmatprep.subr.bf16.mxu0 0
        %1289 = vmatpush1.bf16.msra.mxu0 0
        %1290 = vmatprep.mubr.bf16.mxu0 0
        %1291 = vmatmul.mubr.bf16.gmra.mrb[0].mxu0 %v1250
        %v1292 = vpop.f32.mrb[0].mxu0
        %v1293 = vadd.f32 0.0, %v1292
        %v1294 = vpop.f32.mrb[0].mxu0
        %v1295 = vadd.f32 0.0, %v1294
        %v1296 = vpop.f32.mrb[0].mxu0
        %v1297 = vpop.f32.mrb[0].mxu0
        %1298 = vdwg.mxu0
        %v1299 = vadd.f32 %v1237, %v1293
        %v1300 = vadd.f32 %v1238, %v1295
        %v1301 = vsel %vm663, %v980, 0
        %v1302 = vsel %vm664, %v981, 0
        %v1303 = vsel %vm665, %v982, 0
        %1304 = vrot.lane.b32.xlu0 %v984, 88
        %v1305 = vpop.permute.xlu0 %1304
        %1309 = vrot.lane.b32.xlu0 %v1301, 110
        %v1310 = vpop.permute.xlu0 %1309
        %1311 = vrot.lane.b32.xlu0 %v1302, 110
        %v1312 = vpop.permute.xlu0 %1311
        %1313 = vrot.lane.b32.xlu0 %v1303, 110
        %v1314 = vpop.permute.xlu0 %1313
        %v1315 = vsel %vm680, %v1310, %v1312
        %v1316 = vsel %vm680, %v1312, %v1314
        %v1318 = vsel %vm1001, %v1305, 0
        %v1321 = vsel %vm1005, %v1315, 0
        %v1324 = vsel %vm1005, %v1316, 0
        %1326 = vmatprep.subr.bf16.mxu0 %v1324
        %1327 = vmatpush1.bf16.msra.mxu0 %v1321
        %1328 = vmatprep.subr.bf16.mxu0 0
        %1329 = vmatpush1.bf16.msra.mxu0 0
        %1330 = vmatprep.subr.bf16.mxu0 0
        %1331 = vmatpush1.bf16.msra.mxu0 0
        %1332 = vmatprep.subr.bf16.mxu0 0
        %1333 = vmatpush1.bf16.msra.mxu0 0
        %1334 = vmatprep.subr.bf16.mxu0 0
        %1335 = vmatpush1.bf16.msra.mxu0 0
        %1336 = vmatprep.subr.bf16.mxu0 0
        %1337 = vmatpush1.bf16.msra.mxu0 0
        %1338 = vmatprep.subr.bf16.mxu0 0
        %1339 = vmatpush1.bf16.msra.mxu0 0
        %1340 = vmatprep.subr.bf16.mxu0 0
        %1341 = vmatpush1.bf16.msra.mxu0 0
        %1342 = vmatprep.subr.bf16.mxu0 0
        %1343 = vmatpush1.bf16.msra.mxu0 0
        %1344 = vmatprep.subr.bf16.mxu0 0
        %1345 = vmatpush1.bf16.msra.mxu0 0
        %1346 = vmatprep.subr.bf16.mxu0 0
        %1347 = vmatpush1.bf16.msra.mxu0 0
        %1348 = vmatprep.subr.bf16.mxu0 0
        %1349 = vmatpush1.bf16.msra.mxu0 0
        %1350 = vmatprep.subr.bf16.mxu0 0
        %1351 = vmatpush1.bf16.msra.mxu0 0
        %1352 = vmatprep.subr.bf16.mxu0 0
        %1353 = vmatpush1.bf16.msra.mxu0 0
        %1354 = vmatprep.subr.bf16.mxu0 0
        %1355 = vmatpush1.bf16.msra.mxu0 0
        %1356 = vmatprep.subr.bf16.mxu0 0
        %1357 = vmatpush1.bf16.msra.mxu0 0
        %1358 = vmatprep.mubr.bf16.mxu0 0
        %1359 = vmatmul.mubr.bf16.gmra.mrb[0].mxu0 %v1318
        %v1360 = vpop.f32.mrb[0].mxu0
        %v1361 = vadd.f32 0.0, %v1360
        %v1362 = vpop.f32.mrb[0].mxu0
        %v1363 = vadd.f32 0.0, %v1362
        %v1364 = vpop.f32.mrb[0].mxu0
        %v1365 = vpop.f32.mrb[0].mxu0
        %1366 = vdwg.mxu0
        %v1367 = vadd.f32 %v1299, %v1361
        %v1368 = vadd.f32 %v1300, %v1363
        %v1369 = vsel %vm741, %v980, 0
        %v1370 = vsel %vm742, %v981, 0
        %v1371 = vsel %vm743, %v982, 0
        %1372 = vrot.lane.b32.xlu0 %v984, 80
        %v1373 = vpop.permute.xlu0 %1372
        %1377 = vrot.lane.b32.xlu0 %v1369, 96
        %v1378 = vpop.permute.xlu0 %1377
        %1379 = vrot.lane.b32.xlu0 %v1370, 96
        %v1380 = vpop.permute.xlu0 %1379
        %1381 = vrot.lane.b32.xlu0 %v1371, 96
        %v1382 = vpop.permute.xlu0 %1381
        %v1383 = vsel %vm758, %v1378, %v1380
        %v1384 = vsel %vm758, %v1380, %v1382
        %v1386 = vsel %vm1001, %v1373, 0
        %v1389 = vsel %vm1005, %v1383, 0
        %v1392 = vsel %vm1005, %v1384, 0
        %1394 = vmatprep.subr.bf16.mxu0 %v1392
        %1395 = vmatpush1.bf16.msra.mxu0 %v1389
        %1396 = vmatprep.subr.bf16.mxu0 0
        %1397 = vmatpush1.bf16.msra.mxu0 0
        %1398 = vmatprep.subr.bf16.mxu0 0
        %1399 = vmatpush1.bf16.msra.mxu0 0
        %1400 = vmatprep.subr.bf16.mxu0 0
        %1401 = vmatpush1.bf16.msra.mxu0 0
        %1402 = vmatprep.subr.bf16.mxu0 0
        %1403 = vmatpush1.bf16.msra.mxu0 0
        %1404 = vmatprep.subr.bf16.mxu0 0
        %1405 = vmatpush1.bf16.msra.mxu0 0
        %1406 = vmatprep.subr.bf16.mxu0 0
        %1407 = vmatpush1.bf16.msra.mxu0 0
        %1408 = vmatprep.subr.bf16.mxu0 0
        %1409 = vmatpush1.bf16.msra.mxu0 0
        %1410 = vmatprep.subr.bf16.mxu0 0
        %1411 = vmatpush1.bf16.msra.mxu0 0
        %1412 = vmatprep.subr.bf16.mxu0 0
        %1413 = vmatpush1.bf16.msra.mxu0 0
        %1414 = vmatprep.subr.bf16.mxu0 0
        %1415 = vmatpush1.bf16.msra.mxu0 0
        %1416 = vmatprep.subr.bf16.mxu0 0
        %1417 = vmatpush1.bf16.msra.mxu0 0
        %1418 = vmatprep.subr.bf16.mxu0 0
        %1419 = vmatpush1.bf16.msra.mxu0 0
        %1420 = vmatprep.subr.bf16.mxu0 0
        %1421 = vmatpush1.bf16.msra.mxu0 0
        %1422 = vmatprep.subr.bf16.mxu0 0
        %1423 = vmatpush1.bf16.msra.mxu0 0
        %1424 = vmatprep.subr.bf16.mxu0 0
        %1425 = vmatpush1.bf16.msra.mxu0 0
        %1426 = vmatprep.mubr.bf16.mxu0 0
        %1427 = vmatmul.mubr.bf16.gmra.mrb[0].mxu0 %v1386
        %v1428 = vpop.f32.mrb[0].mxu0
        %v1429 = vadd.f32 0.0, %v1428
        %v1430 = vpop.f32.mrb[0].mxu0
        %v1431 = vadd.f32 0.0, %v1430
        %v1432 = vpop.f32.mrb[0].mxu0
        %v1433 = vpop.f32.mrb[0].mxu0
        %1434 = vdwg.mxu0
        %v1435 = vadd.f32 %v1367, %v1429
        %v1436 = vadd.f32 %v1368, %v1431
        %1437 = vrot.lane.b32.xlu0 %v984, 72
        %v1438 = vpop.permute.xlu0 %1437
        %1439 = vrot.lane.b32.xlu0 %v980, 95
        %v1440 = vpop.permute.xlu0 %1439
        %1441 = vrot.lane.b32.xlu0 %v981, 95
        %v1442 = vpop.permute.xlu0 %1441
        %1443 = vrot.lane.b32.xlu0 %v982, 95
        %v1444 = vpop.permute.xlu0 %1443
        %v1445 = vsel %vm821, %v1440, %v1442
        %v1446 = vsel %vm821, %v1442, %v1444
        %v1448 = vsel %vm1001, %v1438, 0
        %v1451 = vsel %vm1005, %v1445, 0
        %v1454 = vsel %vm1005, %v1446, 0
        %1456 = vmatprep.subr.bf16.mxu0 %v1454
        %1457 = vmatpush1.bf16.msra.mxu0 %v1451
        %1458 = vmatprep.subr.bf16.mxu0 0
        %1459 = vmatpush1.bf16.msra.mxu0 0
        %1460 = vmatprep.subr.bf16.mxu0 0
        %1461 = vmatpush1.bf16.msra.mxu0 0
        %1462 = vmatprep.subr.bf16.mxu0 0
        %1463 = vmatpush1.bf16.msra.mxu0 0
        %1464 = vmatprep.subr.bf16.mxu0 0
        %1465 = vmatpush1.bf16.msra.mxu0 0
        %1466 = vmatprep.subr.bf16.mxu0 0
        %1467 = vmatpush1.bf16.msra.mxu0 0
        %1468 = vmatprep.subr.bf16.mxu0 0
        %1469 = vmatpush1.bf16.msra.mxu0 0
        %1470 = vmatprep.subr.bf16.mxu0 0
        %1471 = vmatpush1.bf16.msra.mxu0 0
        %1472 = vmatprep.subr.bf16.mxu0 0
        %1473 = vmatpush1.bf16.msra.mxu0 0
        %1474 = vmatprep.subr.bf16.mxu0 0
        %1475 = vmatpush1.bf16.msra.mxu0 0
        %1476 = vmatprep.subr.bf16.mxu0 0
        %1477 = vmatpush1.bf16.msra.mxu0 0
        %1478 = vmatprep.subr.bf16.mxu0 0
        %1479 = vmatpush1.bf16.msra.mxu0 0
        %1480 = vmatprep.subr.bf16.mxu0 0
        %1481 = vmatpush1.bf16.msra.mxu0 0
        %1482 = vmatprep.subr.bf16.mxu0 0
        %1483 = vmatpush1.bf16.msra.mxu0 0
        %1484 = vmatprep.subr.bf16.mxu0 0
        %1485 = vmatpush1.bf16.msra.mxu0 0
        %1486 = vmatprep.subr.bf16.mxu0 0
        %1487 = vmatpush1.bf16.msra.mxu0 0
        %1488 = vmatprep.mubr.bf16.mxu0 0
        %1489 = vmatmul.mubr.bf16.gmra.mrb[0].mxu0 %v1448
        %v1490 = vpop.f32.mrb[0].mxu0
        %v1491 = vadd.f32 0.0, %v1490
        %v1492 = vpop.f32.mrb[0].mxu0
        %v1493 = vadd.f32 0.0, %v1492
        %v1494 = vpop.f32.mrb[0].mxu0
        %v1495 = vpop.f32.mrb[0].mxu0
        %1496 = vdwg.mxu0
        %v1497 = vadd.f32 %v1435, %v1491
        %v1498 = vadd.f32 %v1436, %v1493
        %v1499 = vsel %vm882, %v980, 0
        %v1500 = vsel %vm883, %v981, 0
        %v1501 = vsel %vm884, %v982, 0
        %1502 = vrot.lane.b32.xlu0 %v984, 64
        %v1503 = vpop.permute.xlu0 %1502
        %1507 = vrot.lane.b32.xlu0 %v1499, 94
        %v1508 = vpop.permute.xlu0 %1507
        %1509 = vrot.lane.b32.xlu0 %v1500, 94
        %v1510 = vpop.permute.xlu0 %1509
        %1511 = vrot.lane.b32.xlu0 %v1501, 94
        %v1512 = vpop.permute.xlu0 %1511
        %v1513 = vsel %vm899, %v1508, %v1510
        %v1514 = vsel %vm899, %v1510, %v1512
        %v1516 = vsel %vm1001, %v1503, 0
        %v1519 = vsel %vm1005, %v1513, 0
        %v1522 = vsel %vm1005, %v1514, 0
        %1524 = vmatprep.subr.bf16.mxu0 %v1522
        %1525 = vmatpush1.bf16.msra.mxu0 %v1519
        %1526 = vmatprep.subr.bf16.mxu0 0
        %1527 = vmatpush1.bf16.msra.mxu0 0
        %1528 = vmatprep.subr.bf16.mxu0 0
        %1529 = vmatpush1.bf16.msra.mxu0 0
        %1530 = vmatprep.subr.bf16.mxu0 0
        %1531 = vmatpush1.bf16.msra.mxu0 0
        %1532 = vmatprep.subr.bf16.mxu0 0
        %1533 = vmatpush1.bf16.msra.mxu0 0
        %1534 = vmatprep.subr.bf16.mxu0 0
        %1535 = vmatpush1.bf16.msra.mxu0 0
        %1536 = vmatprep.subr.bf16.mxu0 0
        %1537 = vmatpush1.bf16.msra.mxu0 0
        %1538 = vmatprep.subr.bf16.mxu0 0
        %1539 = vmatpush1.bf16.msra.mxu0 0
        %1540 = vmatprep.subr.bf16.mxu0 0
        %1541 = vmatpush1.bf16.msra.mxu0 0
        %1542 = vmatprep.subr.bf16.mxu0 0
        %1543 = vmatpush1.bf16.msra.mxu0 0
        %1544 = vmatprep.subr.bf16.mxu0 0
        %1545 = vmatpush1.bf16.msra.mxu0 0
        %1546 = vmatprep.subr.bf16.mxu0 0
        %1547 = vmatpush1.bf16.msra.mxu0 0
        %1548 = vmatprep.subr.bf16.mxu0 0
        %1549 = vmatpush1.bf16.msra.mxu0 0
        %1550 = vmatprep.subr.bf16.mxu0 0
        %1551 = vmatpush1.bf16.msra.mxu0 0
        %1552 = vmatprep.subr.bf16.mxu0 0
        %1553 = vmatpush1.bf16.msra.mxu0 0
        %1554 = vmatprep.subr.bf16.mxu0 0
        %1555 = vmatpush1.bf16.msra.mxu0 0
        %1556 = vmatprep.mubr.bf16.mxu0 0
        %1557 = vmatmul.mubr.bf16.gmra.mrb[0].mxu0 %v1516
        %v1558 = vpop.f32.mrb[0].mxu0
        %v1559 = vadd.f32 0.0, %v1558
        %v1560 = vpop.f32.mrb[0].mxu0
        %v1561 = vadd.f32 0.0, %v1560
        %v1562 = vpop.f32.mrb[0].mxu0
        %v1563 = vpop.f32.mrb[0].mxu0
        %1564 = vdwg.mxu0
        %v1565 = vadd.f32 %v1497, %v1559
        %v1566 = vadd.f32 %v1498, %v1561
        %v1567 = vld [vmem:[%s4] sm:$0xff]
        %1569 = vset.pattern.permute.xlu0 0
        %1570 = vperm.xlu0 %1569, %v1567
        %v1571 = vpop.permute.xlu0 %1570
        %v1573 = vadd.f32 %v1565, %v1571
        %v1574 = vadd.f32 %v1566, %v1571
        %vm1575 = vcmp.ge.f32.partialorder %v1573, 0.0
        %vm1576 = vcmp.ge.f32.partialorder %v1574, 0.0
        %v1577 = vmul.f32 %v1573, 0.1
        %v1578 = vmul.f32 %v1574, 0.1
        %v1579 = vsel %vm1575, %v1573, %v1577
        %v1580 = vsel %vm1576, %v1574, %v1578
        %1581 = vst [vmem:[%s230] sm:$0xff] %v1579
        %1582 = vst [vmem:[%s230 + $0x8] sm:$0xff] %v1580
        %s1583 = sand.u32 %s138, 1
        %s1584 = scalar_lea.sflag [#allocation4], %s1583
        %s1585 = sand.u32 %s138, 1
        %s1586 = smul.addr %s1585, 16
        %s1587 = scalar_lea.vmem [#allocation5], %s1586
        // Predicated region
        $region45: #{tpu_custom_call.1} parent=39 // pred_check
          %p1588 = pneg %p148
        $region46: #{tpu_custom_call.1} parent=39 // pred_check_branch
          %1590 = sbr.rel (%p1588) target = $region48
        $region47: #{tpu_custom_call.1} parent=39 // pred_region
          %s1592 = ssub.s32 256, 256
          %1593 = vsyncadd %s1584, %s1592
          %s1594 = smul.addr %s20, 2
          %s1595 = smul.addr %s1594, 128
          %s1596 = scalar_lea.hbm %s5, %s1595
          %s1598 = sshll.u32 %s1587, 4
          %s1599 = int_to_ptr.vmem [resolvable:$true] %s1598
          %1601 = dma.vmem_to_hbm [thread:$0]  %s1599, 256, %s1596, %s1584
        $region48: #{tpu_custom_call.1} parent=39 // pred_fallthru
          _
      $region40: #{tpu_custom_call.1} parent=5 // pred_fallthru
        _
      %p1602 = scmp.le.s32.totalorder 2, %s15
      // Predicated region
      $region49: #{tpu_custom_call.1} parent=5 // pred_check
        %p1603 = pneg %p1602
      $region50: #{tpu_custom_call.1} parent=5 // pred_check_branch
        %1605 = sbr.rel (%p1603) target = $region52
      $region51: #{tpu_custom_call.1} parent=5 // pred_region
        %s1606 = ssub.s32 %s15, 2
        // Predicated region
        $region53: #{tpu_custom_call.1} parent=51 // pred_check
          %p1607 = pneg %p154
        $region54: #{tpu_custom_call.1} parent=51 // pred_check_branch
          %1609 = sbr.rel (%p1607) target = $region56
        $region55: #{tpu_custom_call.1} parent=51 // pred_region
          %s1610 = sand.u32 %s139, 1
          %s1611 = scalar_lea.sflag [#allocation4], %s1610
          %s1612 = sand.u32 %s139, 1
          %s1613 = smul.addr %s1612, 16
          %s1614 = scalar_lea.vmem [#allocation5], %s1613
          %1615 = dma.done %s1611, 256
        $region56: #{tpu_custom_call.1} parent=51 // pred_fallthru
          _
      $region52: #{tpu_custom_call.1} parent=5 // pred_fallthru
        _
    $region6: #{tpu_custom_call.1} parent=1 // loop_footer
      %s19 = sadd.s32 1, %s15
    $region7: #{tpu_custom_call.1} parent=1 // loop_footer_branch
      %14 = sbr.rel target = $region3
    $region8: #{tpu_custom_call.1} parent=1 // loop_exit
      _
    %1616 = vsyncpa [#allocation3], 1
    %s1617 = scalar_lea.sflag [#allocation3], 1
    %1618 = vsyncpa %s1617, 1
    %1619 = vsyncpa [#allocation4], 1
    %s1620 = scalar_lea.sflag [#allocation4], 1
    %1621 = vsyncpa %s1620, 1

</llo_original>
